<compile_context>
chip_gen: v7x
topology: tpu7x:2x2x1
jax: 0.10.0
libtpu: 0.0.40
codegen_flags: <defaults>
</compile_context>

<pallas_src>
import jax
import jax.numpy as jnp
from jax import lax
from jax.experimental import pallas as pl
from jax.experimental.pallas import tpu as pltpu


# ---------------------------------------------------------------------------
# Kernel bodies
# ---------------------------------------------------------------------------
def _make_fused_kernel(ksize, pad, w1p, h1, h2, c_mid, c_out):
    """ReLU -> Conv(Kx1) -> Conv(1xK) -> per-image BN partial stats, per image.

    Flat layout: every activation is (C, H*W_row) with row width w1p; a tap of
    the (Kx1) conv is a shift by one padded row (w1p columns) and a tap of the
    (1xK) conv is a shift by one column.  The K-1 flat columns per row that
    would wrap across row boundaries are zeroed with a mask and dropped later.
    """
    m1 = h1 * w1p          # flat size of conv1's output (interior rows)
    m2 = h2 * w1p          # flat size of conv2's (wide) output

    def kernel(x_ref, w1_ref, w2_ref, mask_ref, y_ref, sum_ref, sq_ref, y1p_ref):
        # ReLU fused into conv1 (relu(0) == 0, so the zero pad border is safe).
        x = jnp.maximum(x_ref[0], 0.0)                         # (C_in, Hp*w1p)

        # ---- Conv(Kx1): K flat-shifted matmuls (tap shift = one padded row).
        acc1 = jnp.zeros((c_mid, m1), jnp.float32)
        for t in range(ksize):
            acc1 = acc1 + jnp.dot(w1_ref[t], x[:, t * w1p:t * w1p + m1],
                                  preferred_element_type=jnp.float32)

        # Place conv1's output inside a zero-bordered flat VMEM buffer: this is
        # exactly conv2's zero-padded input (top/bottom pad rows + slack = 0).
        y1p_ref[...] = jnp.zeros_like(y1p_ref)
        y1p_ref[:, pad * w1p:pad * w1p + m1] = acc1
        y1p = y1p_ref[...]                                     # (C_mid, m2+K-1)

        # ---- Conv(1xK): K flat-shifted matmuls (tap shift = one column).
        acc2 = jnp.zeros((c_out, m2), jnp.float32)
        for t in range(ksize):
            acc2 = acc2 + jnp.dot(w2_ref[t], y1p[:, t:t + m2],
                                  preferred_element_type=jnp.float32)

        # Zero the K-1 invalid columns of each flat row, emit y2 (lane-dense
        # store) and the per-image BN partials (lane-axis reduce -> XLU).
        acc2 = acc2 * mask_ref[...]
        y_ref[0] = acc2.astype(y_ref.dtype)
        sum_ref[0] = jnp.sum(acc2, axis=1, keepdims=True)
        sq_ref[0] = jnp.sum(acc2 * acc2, axis=1, keepdims=True)

    return kernel


def _make_bn_kernel(w_valid):
    """(x - mean) * rstd per image, dropping the K-1 invalid columns."""
    def kernel(y_ref, mean_ref, rstd_ref, o_ref):
        y = y_ref[0][:, :, :w_valid]                           # (C_out, H2, W2)
        o_ref[0] = ((y - mean_ref[...]) * rstd_ref[...]).astype(o_ref.dtype)
    return kernel


# ---------------------------------------------------------------------------
# Forward wrapper
# ---------------------------------------------------------------------------
def fac_conv_forward(x, w1, w2, *, kernel_length, stride, padding, eps=1e-5):
    """FacConv forward.

    x : (N, C_in, H, W)   NCHW (PyTorch layout)
    w1: (C_in, C_in, K, 1)  OIHW weight of Conv2d(C_in, C_in, (K, 1))
    w2: (C_out, C_in, 1, K) OIHW weight of Conv2d(C_in, C_out, (1, K))
    """
    n, c_in, h, w = x.shape
    k, s, p = kernel_length, stride, padding
    c_mid = w1.shape[0]
    c_out = w2.shape[0]
    if s != 1:
        # TODO(synk): stride > 1 not implemented in the fused flat-shift kernel.
        raise NotImplementedError("fac_conv_forward: only stride == 1 is supported")

    # Output geometry (stride 1, padding p applied to both dims of both convs).
    hp = h + 2 * p                    # conv1 padded input height
    h1 = hp - k + 1                   # conv1 output height
    w1p = w + 4 * p                   # conv1 output width == conv2 padded width
    h2 = h1 + 2 * p                   # conv2 output height
    w2o = w1p - k + 1                 # conv2 output width
    m2 = h2 * w1p

    f32 = jnp.float32
    # Per-tap weight matrices (tiny).
    w1_mat = jnp.transpose(w1[:, :, :, 0], (2, 0, 1)).astype(f32)   # (K, C_mid, C_in)
    w2_mat = jnp.transpose(w2[:, :, 0, :], (2, 0, 1)).astype(f32)   # (K, C_out, C_mid)

    # Single (small) wrapper layout pass: pad H by p and W by 2p — the extra p
    # columns are conv1-of-zero-columns, i.e. conv2's W padding — then flatten.
    x_pad = jnp.pad(x.astype(f32), ((0, 0), (0, 0), (p, p), (2 * p, 2 * p)))
    x_flat = x_pad.reshape(n, c_in, hp * w1p)

    # 0/1 mask of the valid (first w2o) columns of every flat output row.
    mask = (jnp.arange(m2, dtype=jnp.int32) % w1p < w2o).astype(f32).reshape(1, m2)

    # ---- fused ReLU + Conv(Kx1) + Conv(1xK) + partial BN stats, per image ----
    fused = _make_fused_kernel(k, p, w1p, h1, h2, c_mid, c_out)
    y2_wide, psum, psq = pl.pallas_call(
        fused,
        out_shape=(
            jax.ShapeDtypeStruct((n, c_out, m2), f32),
            jax.ShapeDtypeStruct((n, c_out, 1), f32),
            jax.ShapeDtypeStruct((n, c_out, 1), f32),
        ),
        grid=(n,),
        in_specs=[
            pl.BlockSpec((1, c_in, hp * w1p), lambda i: (i, 0, 0)),
            pl.BlockSpec((k, c_mid, c_in), lambda i: (0, 0, 0)),
            pl.BlockSpec((k, c_out, c_mid), lambda i: (0, 0, 0)),
            pl.BlockSpec((1, m2), lambda i: (0, 0)),
        ],
        out_specs=(
            pl.BlockSpec((1, c_out, m2), lambda i: (i, 0, 0)),
            pl.BlockSpec((1, c_out, 1), lambda i: (i, 0, 0)),
            pl.BlockSpec((1, c_out, 1), lambda i: (i, 0, 0)),
        ),
        scratch_shapes=[pltpu.VMEM((c_mid, m2 + k - 1), f32)],
        compiler_params=pltpu.CompilerParams(dimension_semantics=("parallel",)),
    )(x_flat, w1_mat, w2_mat, mask)

    # ---- BatchNorm2d(affine=False): batch statistics, biased variance ----
    cnt = jnp.float32(n * h2 * w2o)
    mean = jnp.sum(psum, axis=0) / cnt                    # (C_out, 1)
    var = jnp.sum(psq, axis=0) / cnt - mean * mean        # biased variance
    rstd = lax.rsqrt(var + eps)
    mean3 = mean.reshape(c_out, 1, 1)
    rstd3 = rstd.reshape(c_out, 1, 1)

    # ---- normalize + narrow to the valid width; output is NCHW directly ----
    bn = _make_bn_kernel(w2o)
    out = pl.pallas_call(
        bn,
        out_shape=jax.ShapeDtypeStruct((n, c_out, h2, w2o), x.dtype),
        grid=(n,),
        in_specs=[
            pl.BlockSpec((1, c_out, h2, w1p), lambda i: (i, 0, 0, 0)),
            pl.BlockSpec((c_out, 1, 1), lambda i: (0, 0, 0)),
            pl.BlockSpec((c_out, 1, 1), lambda i: (0, 0, 0)),
        ],
        out_specs=pl.BlockSpec((1, c_out, h2, w2o), lambda i: (i, 0, 0, 0)),
        compiler_params=pltpu.CompilerParams(dimension_semantics=("parallel",)),
    )(y2_wide.reshape(n, c_out, h2, w1p), mean3, rstd3)

    return out


if __name__ == "__main__":
    key = jax.random.PRNGKey(0)
    k_x, k_w1, k_w2 = jax.random.split(key, 3)

    N, C_in, H, W = 2, 4, 16, 16
    C_out = 8
    K, STRIDE, PAD = 3, 1, 1

    x = jax.random.normal(k_x, (N, C_in, H, W), dtype=jnp.float32)
    w1 = jax.random.normal(k_w1, (C_in, C_in, K, 1), dtype=jnp.float32) * 0.3
    w2 = jax.random.normal(k_w2, (C_out, C_in, 1, K), dtype=jnp.float32) * 0.3

    out = fac_conv_forward(x, w1, w2, kernel_length=K, stride=STRIDE, padding=PAD)
    out = jax.block_until_ready(out)

    # Pure-JAX reference: ReLU -> Conv(Kx1) -> Conv(1xK) -> BN (batch stats).
    dn = ("NCHW", "OIHW", "NCHW")
    r = jnp.maximum(x, 0.0)
    y1_ref = lax.conv_general_dilated(
        r, w1, (STRIDE, STRIDE), ((PAD, PAD), (PAD, PAD)), dimension_numbers=dn)
    y2_ref = lax.conv_general_dilated(
        y1_ref, w2, (STRIDE, STRIDE), ((PAD, PAD), (PAD, PAD)), dimension_numbers=dn)
    mean_ref = jnp.mean(y2_ref, axis=(0, 2, 3), keepdims=True)
    var_ref = jnp.mean((y2_ref - mean_ref) ** 2, axis=(0, 2, 3), keepdims=True)
    ref = (y2_ref - mean_ref) / jnp.sqrt(var_ref + 1e-5)

    assert out.shape == ref.shape, (out.shape, ref.shape)
    max_err = float(jnp.max(jnp.abs(out - ref)))
    assert jnp.allclose(out, ref, rtol=1e-3, atol=1e-3), f"max |err| = {max_err}"

    print("KERNEL_OK")
</pallas_src>

<mosaic_0001>
module attributes {stable_mosaic.version = 11 : i64} {
  func.func @kernel(%arg0: i32, %arg1: memref<1x4x360xf32, #tpu.memory_space<vmem>>, %arg2: memref<3x4x4xf32, #tpu.memory_space<vmem>>, %arg3: memref<3x8x4xf32, #tpu.memory_space<vmem>>, %arg4: memref<1x360xf32, #tpu.memory_space<vmem>>, %arg5: memref<1x8x360xf32, #tpu.memory_space<vmem>>, %arg6: memref<1x8x1xf32, #tpu.memory_space<vmem>>, %arg7: memref<1x8x1xf32, #tpu.memory_space<vmem>>, %arg8: memref<4x362xf32, #tpu.memory_space<vmem>>) attributes {dimension_semantics = [#tpu.dimension_semantics<parallel>], iteration_bounds = array<i64: 2>, scalar_prefetch = 0 : i64, scratch_operands = 1 : i64, tpu.core_type = #tpu.core_type<tc>, window_params = [{transform_indices = @transform_0, window_bounds = array<i64: 1, 4, 360>}, {pipeline_mode = #tpu.pipeline_mode<synchronous>, transform_indices = @transform_1, window_bounds = array<i64: 3, 4, 4>}, {pipeline_mode = #tpu.pipeline_mode<synchronous>, transform_indices = @transform_2, window_bounds = array<i64: 3, 8, 4>}, {pipeline_mode = #tpu.pipeline_mode<synchronous>, transform_indices = @transform_3, window_bounds = array<i64: 1, 360>}, {transform_indices = @transform_4, window_bounds = array<i64: 1, 8, 360>}, {transform_indices = @transform_5, window_bounds = array<i64: 1, 8, 1>}, {transform_indices = @transform_6, window_bounds = array<i64: 1, 8, 1>}]} {
    %c0 = arith.constant 0 : index
    %c0_0 = arith.constant 0 : index
    %c0_1 = arith.constant 0 : index
    %0 = vector.load %arg1[%c0, %c0_0, %c0_1] : memref<1x4x360xf32, #tpu.memory_space<vmem>>, vector<1x4x360xf32>
    %1 = vector.shape_cast %0 : vector<1x4x360xf32> to vector<4x360xf32>
    %cst = arith.constant 0.000000e+00 : f32
    %2 = vector.broadcast %cst : f32 to vector<4x360xf32>
    %3 = arith.maximumf %1, %2 : vector<4x360xf32>
    %cst_2 = arith.constant 0.000000e+00 : f32
    %4 = vector.broadcast %cst_2 : f32 to vector<4x320xf32>
    %c0_3 = arith.constant 0 : index
    %c0_4 = arith.constant 0 : index
    %c0_5 = arith.constant 0 : index
    %5 = vector.load %arg2[%c0_3, %c0_4, %c0_5] : memref<3x4x4xf32, #tpu.memory_space<vmem>>, vector<1x4x4xf32>
    %6 = vector.shape_cast %5 : vector<1x4x4xf32> to vector<4x4xf32>
    %7 = vector.extract_strided_slice %3 {offsets = [0, 0], sizes = [4, 320], strides = [1, 1]} : vector<4x360xf32> to vector<4x320xf32>
    %cst_6 = arith.constant dense<0.000000e+00> : vector<4x320xf32>
    %8 = tpu.matmul %6, %7, %cst_6 {dimension_numbers = #tpu.dot_dimension_numbers<[1], [0], [0], [1], [0, 0, 1, 1], [], []>} : vector<4x4xf32>, vector<4x320xf32>, vector<4x320xf32> -> vector<4x320xf32>
    %9 = arith.addf %4, %8 : vector<4x320xf32>
    %c1 = arith.constant 1 : index
    %c0_7 = arith.constant 0 : index
    %c0_8 = arith.constant 0 : index
    %10 = vector.load %arg2[%c1, %c0_7, %c0_8] : memref<3x4x4xf32, #tpu.memory_space<vmem>>, vector<1x4x4xf32>
    %11 = vector.shape_cast %10 : vector<1x4x4xf32> to vector<4x4xf32>
    %12 = vector.extract_strided_slice %3 {offsets = [0, 20], sizes = [4, 320], strides = [1, 1]} : vector<4x360xf32> to vector<4x320xf32>
    %cst_9 = arith.constant dense<0.000000e+00> : vector<4x320xf32>
    %13 = tpu.matmul %11, %12, %cst_9 {dimension_numbers = #tpu.dot_dimension_numbers<[1], [0], [0], [1], [0, 0, 1, 1], [], []>} : vector<4x4xf32>, vector<4x320xf32>, vector<4x320xf32> -> vector<4x320xf32>
    %14 = arith.addf %9, %13 : vector<4x320xf32>
    %c2 = arith.constant 2 : index
    %c0_10 = arith.constant 0 : index
    %c0_11 = arith.constant 0 : index
    %15 = vector.load %arg2[%c2, %c0_10, %c0_11] : memref<3x4x4xf32, #tpu.memory_space<vmem>>, vector<1x4x4xf32>
    %16 = vector.shape_cast %15 : vector<1x4x4xf32> to vector<4x4xf32>
    %17 = vector.extract_strided_slice %3 {offsets = [0, 40], sizes = [4, 320], strides = [1, 1]} : vector<4x360xf32> to vector<4x320xf32>
    %cst_12 = arith.constant dense<0.000000e+00> : vector<4x320xf32>
    %18 = tpu.matmul %16, %17, %cst_12 {dimension_numbers = #tpu.dot_dimension_numbers<[1], [0], [0], [1], [0, 0, 1, 1], [], []>} : vector<4x4xf32>, vector<4x320xf32>, vector<4x320xf32> -> vector<4x320xf32>
    %19 = arith.addf %14, %18 : vector<4x320xf32>
    %cst_13 = arith.constant 0.000000e+00 : f32
    %20 = vector.broadcast %cst_13 : f32 to vector<4x362xf32>
    %c0_14 = arith.constant 0 : index
    %c0_15 = arith.constant 0 : index
    %21 = vector.load %arg8[%c0_14, %c0_15] : memref<4x362xf32, #tpu.memory_space<vmem>>, vector<4x362xf32>
    tpu.vector_store %arg8[%c0_14, %c0_15], %20 {strides = array<i32>} : memref<4x362xf32, #tpu.memory_space<vmem>>, vector<4x362xf32>,
    %c0_16 = arith.constant 0 : index
    %c20 = arith.constant 20 : index
    %22 = vector.load %arg8[%c0_16, %c20] : memref<4x362xf32, #tpu.memory_space<vmem>>, vector<4x320xf32>
    tpu.vector_store %arg8[%c0_16, %c20], %19 {strides = array<i32>} : memref<4x362xf32, #tpu.memory_space<vmem>>, vector<4x320xf32>,
    %c0_17 = arith.constant 0 : index
    %c0_18 = arith.constant 0 : index
    %23 = vector.load %arg8[%c0_17, %c0_18] : memref<4x362xf32, #tpu.memory_space<vmem>>, vector<4x362xf32>
    %cst_19 = arith.constant 0.000000e+00 : f32
    %24 = vector.broadcast %cst_19 : f32 to vector<8x360xf32>
    %c0_20 = arith.constant 0 : index
    %c0_21 = arith.constant 0 : index
    %c0_22 = arith.constant 0 : index
    %25 = vector.load %arg3[%c0_20, %c0_21, %c0_22] : memref<3x8x4xf32, #tpu.memory_space<vmem>>, vector<1x8x4xf32>
    %26 = vector.shape_cast %25 : vector<1x8x4xf32> to vector<8x4xf32>
    %27 = vector.extract_strided_slice %23 {offsets = [0, 0], sizes = [4, 360], strides = [1, 1]} : vector<4x362xf32> to vector<4x360xf32>
    %cst_23 = arith.constant dense<0.000000e+00> : vector<8x360xf32>
    %28 = tpu.matmul %26, %27, %cst_23 {dimension_numbers = #tpu.dot_dimension_numbers<[1], [0], [0], [1], [0, 0, 1, 1], [], []>} : vector<8x4xf32>, vector<4x360xf32>, vector<8x360xf32> -> vector<8x360xf32>
    %29 = arith.addf %24, %28 : vector<8x360xf32>
    %c1_24 = arith.constant 1 : index
    %c0_25 = arith.constant 0 : index
    %c0_26 = arith.constant 0 : index
    %30 = vector.load %arg3[%c1_24, %c0_25, %c0_26] : memref<3x8x4xf32, #tpu.memory_space<vmem>>, vector<1x8x4xf32>
    %31 = vector.shape_cast %30 : vector<1x8x4xf32> to vector<8x4xf32>
    %32 = vector.extract_strided_slice %23 {offsets = [0, 1], sizes = [4, 360], strides = [1, 1]} : vector<4x362xf32> to vector<4x360xf32>
    %cst_27 = arith.constant dense<0.000000e+00> : vector<8x360xf32>
    %33 = tpu.matmul %31, %32, %cst_27 {dimension_numbers = #tpu.dot_dimension_numbers<[1], [0], [0], [1], [0, 0, 1, 1], [], []>} : vector<8x4xf32>, vector<4x360xf32>, vector<8x360xf32> -> vector<8x360xf32>
    %34 = arith.addf %29, %33 : vector<8x360xf32>
    %c2_28 = arith.constant 2 : index
    %c0_29 = arith.constant 0 : index
    %c0_30 = arith.constant 0 : index
    %35 = vector.load %arg3[%c2_28, %c0_29, %c0_30] : memref<3x8x4xf32, #tpu.memory_space<vmem>>, vector<1x8x4xf32>
    %36 = vector.shape_cast %35 : vector<1x8x4xf32> to vector<8x4xf32>
    %37 = vector.extract_strided_slice %23 {offsets = [0, 2], sizes = [4, 360], strides = [1, 1]} : vector<4x362xf32> to vector<4x360xf32>
    %cst_31 = arith.constant dense<0.000000e+00> : vector<8x360xf32>
    %38 = tpu.matmul %36, %37, %cst_31 {dimension_numbers = #tpu.dot_dimension_numbers<[1], [0], [0], [1], [0, 0, 1, 1], [], []>} : vector<8x4xf32>, vector<4x360xf32>, vector<8x360xf32> -> vector<8x360xf32>
    %39 = arith.addf %34, %38 : vector<8x360xf32>
    %c0_32 = arith.constant 0 : index
    %c0_33 = arith.constant 0 : index
    %40 = vector.load %arg4[%c0_32, %c0_33] : memref<1x360xf32, #tpu.memory_space<vmem>>, vector<1x360xf32>
    %41 = vector.broadcast %40 : vector<1x360xf32> to vector<8x360xf32>
    %42 = arith.mulf %39, %41 : vector<8x360xf32>
    %c0_34 = arith.constant 0 : index
    %c0_35 = arith.constant 0 : index
    %c0_36 = arith.constant 0 : index
    %43 = vector.load %arg5[%c0_34, %c0_35, %c0_36] : memref<1x8x360xf32, #tpu.memory_space<vmem>>, vector<1x8x360xf32>
    %44 = vector.shape_cast %43 : vector<1x8x360xf32> to vector<8x360xf32>
    %45 = vector.shape_cast %42 : vector<8x360xf32> to vector<1x8x360xf32>
    tpu.vector_store %arg5[%c0_34, %c0_35, %c0_36], %45 {strides = array<i32>} : memref<1x8x360xf32, #tpu.memory_space<vmem>>, vector<1x8x360xf32>,
    %cst_37 = arith.constant dense<0.000000e+00> : vector<8xf32>
    %46 = vector.multi_reduction <add>, %42, %cst_37 [1] : vector<8x360xf32> to vector<8xf32>
    %47 = vector.shape_cast %46 : vector<8xf32> to vector<8x1xf32>
    %c0_38 = arith.constant 0 : index
    %c0_39 = arith.constant 0 : index
    %c0_40 = arith.constant 0 : index
    %48 = vector.load %arg6[%c0_38, %c0_39, %c0_40] : memref<1x8x1xf32, #tpu.memory_space<vmem>>, vector<1x8x1xf32>
    %49 = vector.shape_cast %48 : vector<1x8x1xf32> to vector<8x1xf32>
    %50 = vector.shape_cast %47 : vector<8x1xf32> to vector<1x8x1xf32>
    tpu.vector_store %arg6[%c0_38, %c0_39, %c0_40], %50 {strides = array<i32>} : memref<1x8x1xf32, #tpu.memory_space<vmem>>, vector<1x8x1xf32>,
    %51 = arith.mulf %42, %42 : vector<8x360xf32>
    %cst_41 = arith.constant dense<0.000000e+00> : vector<8xf32>
    %52 = vector.multi_reduction <add>, %51, %cst_41 [1] : vector<8x360xf32> to vector<8xf32>
    %53 = vector.shape_cast %52 : vector<8xf32> to vector<8x1xf32>
    %c0_42 = arith.constant 0 : index
    %c0_43 = arith.constant 0 : index
    %c0_44 = arith.constant 0 : index
    %54 = vector.load %arg7[%c0_42, %c0_43, %c0_44] : memref<1x8x1xf32, #tpu.memory_space<vmem>>, vector<1x8x1xf32>
    %55 = vector.shape_cast %54 : vector<1x8x1xf32> to vector<8x1xf32>
    %56 = vector.shape_cast %53 : vector<8x1xf32> to vector<1x8x1xf32>
    tpu.vector_store %arg7[%c0_42, %c0_43, %c0_44], %56 {strides = array<i32>} : memref<1x8x1xf32, #tpu.memory_space<vmem>>, vector<1x8x1xf32>,
    return
  }
  func.func @transform_0(%arg0: i32) -> (i32, i32, i32) {
    %c0_i32 = arith.constant 0 : i32
    %c0_i32_0 = arith.constant 0 : i32
    %c0_i32_1 = arith.constant 0 : i32
    return %arg0, %c0_i32, %c0_i32_0 : i32, i32, i32
  }
  func.func @transform_1(%arg0: i32) -> (i32, i32, i32) {
    %c0_i32 = arith.constant 0 : i32
    %c0_i32_0 = arith.constant 0 : i32
    %c0_i32_1 = arith.constant 0 : i32
    %c0_i32_2 = arith.constant 0 : i32
    return %c0_i32, %c0_i32_0, %c0_i32_1 : i32, i32, i32
  }
  func.func @transform_2(%arg0: i32) -> (i32, i32, i32) {
    %c0_i32 = arith.constant 0 : i32
    %c0_i32_0 = arith.constant 0 : i32
    %c0_i32_1 = arith.constant 0 : i32
    %c0_i32_2 = arith.constant 0 : i32
    return %c0_i32, %c0_i32_0, %c0_i32_1 : i32, i32, i32
  }
  func.func @transform_3(%arg0: i32) -> (i32, i32) {
    %c0_i32 = arith.constant 0 : i32
    %c0_i32_0 = arith.constant 0 : i32
    %c0_i32_1 = arith.constant 0 : i32
    return %c0_i32, %c0_i32_0 : i32, i32
  }
  func.func @transform_4(%arg0: i32) -> (i32, i32, i32) {
    %c0_i32 = arith.constant 0 : i32
    %c0_i32_0 = arith.constant 0 : i32
    %c0_i32_1 = arith.constant 0 : i32
    return %arg0, %c0_i32, %c0_i32_0 : i32, i32, i32
  }
  func.func @transform_5(%arg0: i32) -> (i32, i32, i32) {
    %c0_i32 = arith.constant 0 : i32
    %c0_i32_0 = arith.constant 0 : i32
    %c0_i32_1 = arith.constant 0 : i32
    return %arg0, %c0_i32, %c0_i32_0 : i32, i32, i32
  }
  func.func @transform_6(%arg0: i32) -> (i32, i32, i32) {
    %c0_i32 = arith.constant 0 : i32
    %c0_i32_0 = arith.constant 0 : i32
    %c0_i32_1 = arith.constant 0 : i32
    return %arg0, %c0_i32, %c0_i32_0 : i32, i32, i32
  }
}

</mosaic_0001>

<llo_original>
// kernel: tpu_custom_call.1
$region0: #{tpu_custom_call.1}
  #allocation0 [shape = 'u32[]', space=smem, size = 0x4, offset = 0x4, fixed_abs, tag = 'smem constant byte address 0x4 - core index']
  #allocation1 [shape = 'u32[144,128]{1,0:T(1,128)}', space=vmem, size = 0x12000, scoped, tag = 'internal scratch']
  #allocation2 [shape = 'f32[4,362]{1,0:T(4,128)}', space=vmem, size = 0x1800, scoped, tag = 'scratch operand']
  %s0 = inlined_call_operand.vmem [shape: f32[2,4,360], index: 0, kind: input, shape index: {}]
  %s1 = inlined_call_operand.vmem [shape: f32[3,4,4], index: 1, kind: input, shape index: {}]
  %s2 = inlined_call_operand.vmem [shape: f32[3,8,4], index: 2, kind: input, shape index: {}]
  %s3 = inlined_call_operand.vmem [shape: f32[1,360], index: 3, kind: input, shape index: {}]
  %s4 = inlined_call_operand.hbm [shape: f32[2,8,360], index: 4, kind: output, shape index: {0}]
  %s5 = inlined_call_operand.vmem [shape: f32[2,8,1], index: 5, kind: output, shape index: {1}]
  %s6 = inlined_call_operand.vmem [shape: f32[2,8,1], index: 6, kind: output, shape index: {2}]
  %7 = xla_tuple %s4, %s5, %s6
  %s8 = sld [smem:[#allocation0]]
  $region65: #{tpu_custom_call.1} parent=0
    _
  %s10 = ssub.s32 1, %s8
  %s11 = scalar_select 0, %s10, %s8
  $region1: #{tpu_custom_call.1} parent=0
    #allocation3 [shape = 'u8[24576]{0}', space=vmem, size = 0x6000, scoped, tag = 'output window, operand 0']
    #allocation4 [shape = 's32[2]{0}', space=sflag, size = 0x8, scoped, tag = 'scoped memory for tpu_custom_call.1']
    %12 = vsyncpa [#allocation4], 0
    %s13 = scalar_lea.sflag [#allocation4], 1
    %14 = vsyncpa %s13, 0
    loop: start=0, step=1, limit=4
    $region2: #{tpu_custom_call.1} parent=1 // loop_pre_header
      _
    $region3: #{tpu_custom_call.1} parent=1 // loop_header
      %s16 = sphi 0, %s20
      %p17 = scmp.ge.s32.totalorder %s16, 4
      %s26 = sphi 0, %s28
      %s29 = sphi 0, %s26
      %s30 = sphi 0, %s29
      %s46 = sphi 0, %s30
      %s50 = sphi 0, %s50
      %s52 = sphi 0, %s50
      %s53 = sphi 0, %s52
      %s67 = sphi 0, %s53
      %s71 = sphi 0, %s71
      %s73 = sphi 0, %s71
      %s74 = sphi 0, %s73
      %s88 = sphi 0, %s74
      %s92 = sphi 0, %s92
      %s94 = sphi 0, %s92
      %s95 = sphi 0, %s94
      %s109 = sphi 0, %s95
      %s115 = sphi 0, %s117
      %s118 = sphi 0, %s115
      %s119 = sphi 0, %s118
      %s135 = sphi 0, %s119
      %s141 = sphi 0, %s143
      %s144 = sphi 0, %s141
      %s145 = sphi 0, %s144
      %s161 = sphi 0, %s145
      %s167 = sphi 0, %s169
      %s170 = sphi 0, %s167
      %s171 = sphi 0, %s170
      %s187 = sphi 0, %s171
    $region4: #{tpu_custom_call.1} parent=1 // loop_header_branch
      %19 = sbr.rel (%p17) target = $region8
    $region5: #{tpu_custom_call.1} parent=1 // loop_body
      %s21 = ssub.s32 %s16, 1
      %s22 = ssub.s32 %s16, 2
      %s23 = sadd.s32 %s16, 1
      %s24 = ssub.s32 %s16, %s23
      %p25 = scmp.eq.s32.totalorder %s24, 0
      %s27 = sadd.s32 %s26, 1
      %s28 = scalar_select %p25, %s26, %s27
      %p31 = pneg %p25
      %p32 = scmp.eq.s32.totalorder %s16, 1
      %p33 = por %p31, %p32
      %p34 = scmp.ne.s32.totalorder %s26, %s29
      %p35 = scmp.eq.s32.totalorder %s16, 0
      %p36 = por %p34, %p35
      %p37 = scmp.ne.s32.totalorder %s26, %s29
      %p38 = scmp.eq.s32.totalorder %s21, 1
      %p39 = por %p37, %p38
      %p40 = scmp.ne.s32.totalorder %s29, %s30
      %p41 = scmp.eq.s32.totalorder %s21, 0
      %p42 = por %p40, %p41
      %p43 = scmp.ne.s32.totalorder %s29, %s30
      %p44 = scmp.eq.s32.totalorder %s22, 1
      %p45 = por %p43, %p44
      %p47 = scmp.ne.s32.totalorder %s30, %s46
      %p48 = scmp.eq.s32.totalorder %s22, 0
      %p49 = por %p47, %p48
      %s51 = sadd.s32 %s50, 1
      %p54 = scmp.eq.s32.totalorder %s16, 1
      %p55 = scmp.ne.s32.totalorder %s50, %s52
      %p56 = scmp.eq.s32.totalorder %s16, 0
      %p57 = por %p55, %p56
      %p58 = scmp.ne.s32.totalorder %s50, %s52
      %p59 = scmp.eq.s32.totalorder %s21, 1
      %p60 = por %p58, %p59
      %p61 = scmp.ne.s32.totalorder %s52, %s53
      %p62 = scmp.eq.s32.totalorder %s21, 0
      %p63 = por %p61, %p62
      %p64 = scmp.ne.s32.totalorder %s52, %s53
      %p65 = scmp.eq.s32.totalorder %s22, 1
      %p66 = por %p64, %p65
      %p68 = scmp.ne.s32.totalorder %s53, %s67
      %p69 = scmp.eq.s32.totalorder %s22, 0
      %p70 = por %p68, %p69
      %s72 = sadd.s32 %s71, 1
      %p75 = scmp.eq.s32.totalorder %s16, 1
      %p76 = scmp.ne.s32.totalorder %s71, %s73
      %p77 = scmp.eq.s32.totalorder %s16, 0
      %p78 = por %p76, %p77
      %p79 = scmp.ne.s32.totalorder %s71, %s73
      %p80 = scmp.eq.s32.totalorder %s21, 1
      %p81 = por %p79, %p80
      %p82 = scmp.ne.s32.totalorder %s73, %s74
      %p83 = scmp.eq.s32.totalorder %s21, 0
      %p84 = por %p82, %p83
      %p85 = scmp.ne.s32.totalorder %s73, %s74
      %p86 = scmp.eq.s32.totalorder %s22, 1
      %p87 = por %p85, %p86
      %p89 = scmp.ne.s32.totalorder %s74, %s88
      %p90 = scmp.eq.s32.totalorder %s22, 0
      %p91 = por %p89, %p90
      %s93 = sadd.s32 %s92, 1
      %p96 = scmp.eq.s32.totalorder %s16, 1
      %p97 = scmp.ne.s32.totalorder %s92, %s94
      %p98 = scmp.eq.s32.totalorder %s16, 0
      %p99 = por %p97, %p98
      %p100 = scmp.ne.s32.totalorder %s92, %s94
      %p101 = scmp.eq.s32.totalorder %s21, 1
      %p102 = por %p100, %p101
      %p103 = scmp.ne.s32.totalorder %s94, %s95
      %p104 = scmp.eq.s32.totalorder %s21, 0
      %p105 = por %p103, %p104
      %p106 = scmp.ne.s32.totalorder %s94, %s95
      %p107 = scmp.eq.s32.totalorder %s22, 1
      %p108 = por %p106, %p107
      %p110 = scmp.ne.s32.totalorder %s95, %s109
      %p111 = scmp.eq.s32.totalorder %s22, 0
      %p112 = por %p110, %p111
      %s113 = ssub.s32 %s16, %s23
      %p114 = scmp.eq.s32.totalorder %s113, 0
      %s116 = sadd.s32 %s115, 1
      %s117 = scalar_select %p114, %s115, %s116
      %p120 = pneg %p114
      %p121 = scmp.eq.s32.totalorder %s16, 1
      %p122 = por %p120, %p121
      %p123 = scmp.ne.s32.totalorder %s115, %s118
      %p124 = scmp.eq.s32.totalorder %s16, 0
      %p125 = por %p123, %p124
      %p126 = scmp.ne.s32.totalorder %s115, %s118
      %p127 = scmp.eq.s32.totalorder %s21, 1
      %p128 = por %p126, %p127
      %p129 = scmp.ne.s32.totalorder %s118, %s119
      %p130 = scmp.eq.s32.totalorder %s21, 0
      %p131 = por %p129, %p130
      %p132 = scmp.ne.s32.totalorder %s118, %s119
      %p133 = scmp.eq.s32.totalorder %s22, 1
      %p134 = por %p132, %p133
      %p136 = scmp.ne.s32.totalorder %s119, %s135
      %p137 = scmp.eq.s32.totalorder %s22, 0
      %p138 = por %p136, %p137
      %s139 = ssub.s32 %s16, %s23
      %p140 = scmp.eq.s32.totalorder %s139, 0
      %s142 = sadd.s32 %s141, 1
      %s143 = scalar_select %p140, %s141, %s142
      %p146 = pneg %p140
      %p147 = scmp.eq.s32.totalorder %s16, 1
      %p148 = por %p146, %p147
      %p149 = scmp.ne.s32.totalorder %s141, %s144
      %p150 = scmp.eq.s32.totalorder %s16, 0
      %p151 = por %p149, %p150
      %p152 = scmp.ne.s32.totalorder %s141, %s144
      %p153 = scmp.eq.s32.totalorder %s21, 1
      %p154 = por %p152, %p153
      %p155 = scmp.ne.s32.totalorder %s144, %s145
      %p156 = scmp.eq.s32.totalorder %s21, 0
      %p157 = por %p155, %p156
      %p158 = scmp.ne.s32.totalorder %s144, %s145
      %p159 = scmp.eq.s32.totalorder %s22, 1
      %p160 = por %p158, %p159
      %p162 = scmp.ne.s32.totalorder %s145, %s161
      %p163 = scmp.eq.s32.totalorder %s22, 0
      %p164 = por %p162, %p163
      %s165 = ssub.s32 %s16, %s23
      %p166 = scmp.eq.s32.totalorder %s165, 0
      %s168 = sadd.s32 %s167, 1
      %s169 = scalar_select %p166, %s167, %s168
      %p172 = pneg %p166
      %p173 = scmp.eq.s32.totalorder %s16, 1
      %p174 = por %p172, %p173
      %p175 = scmp.ne.s32.totalorder %s167, %s170
      %p176 = scmp.eq.s32.totalorder %s16, 0
      %p177 = por %p175, %p176
      %p178 = scmp.ne.s32.totalorder %s167, %s170
      %p179 = scmp.eq.s32.totalorder %s21, 1
      %p180 = por %p178, %p179
      %p181 = scmp.ne.s32.totalorder %s170, %s171
      %p182 = scmp.eq.s32.totalorder %s21, 0
      %p183 = por %p181, %p182
      %p184 = scmp.ne.s32.totalorder %s170, %s171
      %p185 = scmp.eq.s32.totalorder %s22, 1
      %p186 = por %p184, %p185
      %p188 = scmp.ne.s32.totalorder %s171, %s187
      %p189 = scmp.eq.s32.totalorder %s22, 0
      %p190 = por %p188, %p189
      %p191 = scmp.le.s32.totalorder 1, %s16
      %p192 = scmp.lt.s32.totalorder %s16, 3
      %p193 = pnand %p191, %p192
      %p194 = pneg %p193
      // Predicated region
      $region9: #{tpu_custom_call.1} parent=5 // pred_check
        _
      $region10: #{tpu_custom_call.1} parent=5 // pred_check_branch
        %196 = sbr.rel (%p193) target = $region12
      $region11: #{tpu_custom_call.1} parent=5 // pred_region
        %s197 = ssub.s32 %s16, 1
        // Predicated region
        $region13: #{tpu_custom_call.1} parent=11 // pred_check
          %p198 = pneg %p63
        $region14: #{tpu_custom_call.1} parent=11 // pred_check_branch
          %200 = sbr.rel (%p198) target = $region16
        $region15: #{tpu_custom_call.1} parent=11 // pred_region
          _
        $region16: #{tpu_custom_call.1} parent=11 // pred_fallthru
          _
        // Predicated region
        $region17: #{tpu_custom_call.1} parent=11 // pred_check
          %p201 = pneg %p84
        $region18: #{tpu_custom_call.1} parent=11 // pred_check_branch
          %203 = sbr.rel (%p201) target = $region20
        $region19: #{tpu_custom_call.1} parent=11 // pred_region
          _
        $region20: #{tpu_custom_call.1} parent=11 // pred_fallthru
          _
        // Predicated region
        $region21: #{tpu_custom_call.1} parent=11 // pred_check
          %p204 = pneg %p105
        $region22: #{tpu_custom_call.1} parent=11 // pred_check_branch
          %206 = sbr.rel (%p204) target = $region24
        $region23: #{tpu_custom_call.1} parent=11 // pred_region
          _
        $region24: #{tpu_custom_call.1} parent=11 // pred_fallthru
          _
      $region12: #{tpu_custom_call.1} parent=5 // pred_fallthru
        _
      %p207 = scmp.lt.s32.totalorder %s16, 2
      // Predicated region
      $region25: #{tpu_custom_call.1} parent=5 // pred_check
        %p208 = pneg %p207
      $region26: #{tpu_custom_call.1} parent=5 // pred_check_branch
        %210 = sbr.rel (%p208) target = $region28
      $region27: #{tpu_custom_call.1} parent=5 // pred_region
        // Predicated region
        $region29: #{tpu_custom_call.1} parent=27 // pred_check
          %p211 = pneg %p36
        $region30: #{tpu_custom_call.1} parent=27 // pred_check_branch
          %213 = sbr.rel (%p211) target = $region32
        $region31: #{tpu_custom_call.1} parent=27 // pred_region
          %p214 = scmp.lt.s32.totalorder %s16, 1
          %s215 = scalar_select %p214, %s16, 1
          %s216 = smul.addr %s215, 3
          %s217 = smul.addr %s216, 4
          %s218 = scalar_lea.vmem %s0, %s217
        $region32: #{tpu_custom_call.1} parent=27 // pred_fallthru
          _
      $region28: #{tpu_custom_call.1} parent=5 // pred_fallthru
        _
      %p219 = scmp.le.s32.totalorder 1, %s16
      %p220 = scmp.lt.s32.totalorder %s16, 3
      %p221 = pnand %p219, %p220
      %p222 = pneg %p221
      // Predicated region
      $region33: #{tpu_custom_call.1} parent=5 // pred_check
        _
      $region34: #{tpu_custom_call.1} parent=5 // pred_check_branch
        %224 = sbr.rel (%p221) target = $region36
      $region35: #{tpu_custom_call.1} parent=5 // pred_region
        %s225 = ssub.s32 %s16, 1
        %p226 = scmp.lt.s32.totalorder %s21, 1
        %s227 = scalar_select %p226, %s21, 1
        %s228 = smul.addr %s227, 3
        %s229 = smul.addr %s228, 4
        %s230 = scalar_lea.vmem %s0, %s229
        %p231 = pneg %p42
        %p232 = pneg %p39
        %p233 = pneg %p63
        %p234 = pneg %p60
        %p235 = pneg %p84
        %p236 = pneg %p81
        %p237 = pneg %p105
        %p238 = pneg %p102
        %p239 = pneg %p131
        %p240 = pneg %p128
        %s241 = sand.u32 %s118, 1
        %s242 = scalar_lea.sflag [#allocation4], %s241
        %s243 = sand.u32 %s118, 1
        %s244 = smul.addr %s243, 24
        %s245 = scalar_lea.vmem [#allocation3], %s244
        %p246 = pneg %p157
        %p247 = pneg %p154
        %p248 = scmp.lt.s32.totalorder %s21, 1
        %s249 = scalar_select %p248, %s21, 1
        %s250 = smul.addr %s249, 8
        %s251 = scalar_lea.vmem %s5, %s250
        %p252 = pneg %p183
        %p253 = pneg %p180
        %p254 = scmp.lt.s32.totalorder %s21, 1
        %s255 = scalar_select %p254, %s21, 1
        %s256 = smul.addr %s255, 8
        %s257 = scalar_lea.vmem %s6, %s256
        %p258 = scmp.lt.s32.totalorder %s21, 1
        %s259 = scalar_select %p258, %s21, 1
        %s260 = smul.addr %s259, 3
        %s261 = smul.addr %s260, 4
        %s262 = scalar_lea.vmem %s0, %s261
        %p263 = scmp.lt.s32.totalorder %s21, 1
        %s264 = scalar_select %p263, %s21, 1
        %s265 = smul.addr %s264, 8
        %s266 = scalar_lea.vmem %s5, %s265
        %p267 = scmp.lt.s32.totalorder %s21, 1
        %s268 = scalar_select %p267, %s21, 1
        %s269 = smul.addr %s268, 8
        %s270 = scalar_lea.vmem %s6, %s269
        %v271 = vld [vmem:[%s262] sm:$0xff]
        %v272 = vld [vmem:[%s262 + $0x8] sm:$0xf]
        %v273 = vmax.f32 %v271, 0.0
        %v274 = vmax.f32 %v272, 0.0
        %v275 = vld [vmem:[%s1] sm:$0xf]
        %s276 = scalar_lea.vmem %s1, 4
        %v277 = vld [vmem:[%s276] sm:$0xf]
        %v280 = vcombine.high %v273, %v273
        %281 = vrot.lane.b32.xlu0 %v273, 108
        %v282 = vpop.permute.xlu0 %281
        %283 = vrot.lane.b32.xlu0 %v280, 108
        %v284 = vpop.permute.xlu0 %283
        %285 = vrot.lane.b32.xlu0 %v274, 108
        %v286 = vpop.permute.xlu0 %285
        %vm287 = vcmask 883712
        %v288 = vsel %vm287, %v282, %v284
        %v289 = vsel %vm287, %v284, %v286
        %vm290 = vcmask 31744
        %v292 = vsel %vm290, %v277, 0
        %vm294 = vcmask 1043456
        %v295 = vsel %vm294, %v288, 0
        %v297 = vsel %vm294, %v289, 0
        %v299 = vsel %vm294, %v286, 0
        %301 = vmatprep.subr.mxu0 %v297
        %302 = vmatpush1.msra.mxu0 %v295
        %303 = vmatprep.subr.mxu0 0.0
        %304 = vmatpush1.msra.mxu0 0.0
        %305 = vmatprep.subr.mxu0 0.0
        %306 = vmatpush1.msra.mxu0 0.0
        %307 = vmatprep.subr.mxu0 0.0
        %308 = vmatpush1.msra.mxu0 0.0
        %309 = vmatprep.subr.mxu0 0.0
        %310 = vmatpush1.msra.mxu0 0.0
        %311 = vmatprep.subr.mxu0 0.0
        %312 = vmatpush1.msra.mxu0 0.0
        %313 = vmatprep.subr.mxu0 0.0
        %314 = vmatpush1.msra.mxu0 0.0
        %315 = vmatprep.subr.mxu0 0.0
        %316 = vmatpush1.msra.mxu0 0.0
        %317 = vmatprep.subr.mxu0 0.0
        %318 = vmatpush1.msra.mxu0 0.0
        %319 = vmatprep.subr.mxu0 0.0
        %320 = vmatpush1.msra.mxu0 0.0
        %321 = vmatprep.subr.mxu0 0.0
        %322 = vmatpush1.msra.mxu0 0.0
        %323 = vmatprep.subr.mxu0 0.0
        %324 = vmatpush1.msra.mxu0 0.0
        %325 = vmatprep.subr.mxu0 0.0
        %326 = vmatpush1.msra.mxu0 0.0
        %327 = vmatprep.subr.mxu0 0.0
        %328 = vmatpush1.msra.mxu0 0.0
        %329 = vmatprep.subr.mxu0 0.0
        %330 = vmatpush1.msra.mxu0 0.0
        %331 = vmatprep.subr.mxu0 0.0
        %332 = vmatpush1.msra.mxu0 0.0
        %333 = vmatprep.subr.mxu0 0.0
        %334 = vmatpush1.msra.mxu0 0.0
        %335 = vmatprep.subr.mxu0 0.0
        %336 = vmatpush1.msra.mxu0 0.0
        %337 = vmatprep.subr.mxu0 0.0
        %338 = vmatpush1.msra.mxu0 0.0
        %339 = vmatprep.subr.mxu0 0.0
        %340 = vmatpush1.msra.mxu0 0.0
        %341 = vmatprep.subr.mxu0 0.0
        %342 = vmatpush1.msra.mxu0 0.0
        %343 = vmatprep.subr.mxu0 0.0
        %344 = vmatpush1.msra.mxu0 0.0
        %345 = vmatprep.subr.mxu0 0.0
        %346 = vmatpush1.msra.mxu0 0.0
        %347 = vmatprep.subr.mxu0 0.0
        %348 = vmatpush1.msra.mxu0 0.0
        %349 = vmatprep.subr.mxu0 0.0
        %350 = vmatpush1.msra.mxu0 0.0
        %351 = vmatprep.subr.mxu0 0.0
        %352 = vmatpush1.msra.mxu0 0.0
        %353 = vmatprep.subr.mxu0 0.0
        %354 = vmatpush1.msra.mxu0 0.0
        %355 = vmatprep.subr.mxu0 0.0
        %356 = vmatpush1.msra.mxu0 0.0
        %357 = vmatprep.subr.mxu0 0.0
        %358 = vmatpush1.msra.mxu0 0.0
        %359 = vmatprep.subr.mxu0 0.0
        %360 = vmatpush1.msra.mxu0 0.0
        %361 = vmatprep.subr.mxu0 0.0
        %362 = vmatpush1.msra.mxu0 0.0
        %363 = vmatprep.subr.mxu0 0.0
        %364 = vmatpush1.msra.mxu0 0.0
        %365 = vmatprep.mubr.f32.mxu0 0.0
        %366 = vmatmul.mubr.f32.gmra.mrb[0].mxu0 %v292
        %v367 = vpop.f32.mrb[0].mxu0
        %v368 = vadd.f32 0.0, %v367
        %v369 = vpop.f32.mrb[0].mxu0
        %v370 = vadd.f32 0.0, %v369
        %371 = vdwg.mxu0
        %372 = vmatprep.subr.mxu0 0.0
        %373 = vmatpush1.msra.mxu0 %v299
        %374 = vmatprep.subr.mxu0 0.0
        %375 = vmatpush1.msra.mxu0 0.0
        %376 = vmatprep.subr.mxu0 0.0
        %377 = vmatpush1.msra.mxu0 0.0
        %378 = vmatprep.subr.mxu0 0.0
        %379 = vmatpush1.msra.mxu0 0.0
        %380 = vmatprep.subr.mxu0 0.0
        %381 = vmatpush1.msra.mxu0 0.0
        %382 = vmatprep.subr.mxu0 0.0
        %383 = vmatpush1.msra.mxu0 0.0
        %384 = vmatprep.subr.mxu0 0.0
        %385 = vmatpush1.msra.mxu0 0.0
        %386 = vmatprep.subr.mxu0 0.0
        %387 = vmatpush1.msra.mxu0 0.0
        %388 = vmatprep.subr.mxu0 0.0
        %389 = vmatpush1.msra.mxu0 0.0
        %390 = vmatprep.subr.mxu0 0.0
        %391 = vmatpush1.msra.mxu0 0.0
        %392 = vmatprep.subr.mxu0 0.0
        %393 = vmatpush1.msra.mxu0 0.0
        %394 = vmatprep.subr.mxu0 0.0
        %395 = vmatpush1.msra.mxu0 0.0
        %396 = vmatprep.subr.mxu0 0.0
        %397 = vmatpush1.msra.mxu0 0.0
        %398 = vmatprep.subr.mxu0 0.0
        %399 = vmatpush1.msra.mxu0 0.0
        %400 = vmatprep.subr.mxu0 0.0
        %401 = vmatpush1.msra.mxu0 0.0
        %402 = vmatprep.subr.mxu0 0.0
        %403 = vmatpush1.msra.mxu0 0.0
        %404 = vmatprep.subr.mxu0 0.0
        %405 = vmatpush1.msra.mxu0 0.0
        %406 = vmatprep.subr.mxu0 0.0
        %407 = vmatpush1.msra.mxu0 0.0
        %408 = vmatprep.subr.mxu0 0.0
        %409 = vmatpush1.msra.mxu0 0.0
        %410 = vmatprep.subr.mxu0 0.0
        %411 = vmatpush1.msra.mxu0 0.0
        %412 = vmatprep.subr.mxu0 0.0
        %413 = vmatpush1.msra.mxu0 0.0
        %414 = vmatprep.subr.mxu0 0.0
        %415 = vmatpush1.msra.mxu0 0.0
        %416 = vmatprep.subr.mxu0 0.0
        %417 = vmatpush1.msra.mxu0 0.0
        %418 = vmatprep.subr.mxu0 0.0
        %419 = vmatpush1.msra.mxu0 0.0
        %420 = vmatprep.subr.mxu0 0.0
        %421 = vmatpush1.msra.mxu0 0.0
        %422 = vmatprep.subr.mxu0 0.0
        %423 = vmatpush1.msra.mxu0 0.0
        %424 = vmatprep.subr.mxu0 0.0
        %425 = vmatpush1.msra.mxu0 0.0
        %426 = vmatprep.subr.mxu0 0.0
        %427 = vmatpush1.msra.mxu0 0.0
        %428 = vmatprep.subr.mxu0 0.0
        %429 = vmatpush1.msra.mxu0 0.0
        %430 = vmatprep.subr.mxu0 0.0
        %431 = vmatpush1.msra.mxu0 0.0
        %432 = vmatprep.subr.mxu0 0.0
        %433 = vmatpush1.msra.mxu0 0.0
        %434 = vmatprep.subr.mxu0 0.0
        %435 = vmatpush1.msra.mxu0 0.0
        %436 = vmatprep.mubr.f32.mxu0 0.0
        %437 = vmatmul.mubr.f32.gmra.mrb[0].mxu0 %v292
        %v438 = vpop.f32.mrb[0].mxu0
        %v439 = vadd.f32 0.0, %v438
        %v440 = vpop.f32.mrb[0].mxu0
        %441 = vdwg.mxu0
        %v443 = vsel %vm290, %v275, 0
        %v445 = vsel %vm294, %v273, 0
        %v447 = vsel %vm294, %v280, 0
        %v449 = vsel %vm294, %v274, 0
        %451 = vmatprep.subr.mxu0 %v447
        %452 = vmatpush1.msra.mxu0 %v445
        %453 = vmatprep.subr.mxu0 0.0
        %454 = vmatpush1.msra.mxu0 0.0
        %455 = vmatprep.subr.mxu0 0.0
        %456 = vmatpush1.msra.mxu0 0.0
        %457 = vmatprep.subr.mxu0 0.0
        %458 = vmatpush1.msra.mxu0 0.0
        %459 = vmatprep.subr.mxu0 0.0
        %460 = vmatpush1.msra.mxu0 0.0
        %461 = vmatprep.subr.mxu0 0.0
        %462 = vmatpush1.msra.mxu0 0.0
        %463 = vmatprep.subr.mxu0 0.0
        %464 = vmatpush1.msra.mxu0 0.0
        %465 = vmatprep.subr.mxu0 0.0
        %466 = vmatpush1.msra.mxu0 0.0
        %467 = vmatprep.subr.mxu0 0.0
        %468 = vmatpush1.msra.mxu0 0.0
        %469 = vmatprep.subr.mxu0 0.0
        %470 = vmatpush1.msra.mxu0 0.0
        %471 = vmatprep.subr.mxu0 0.0
        %472 = vmatpush1.msra.mxu0 0.0
        %473 = vmatprep.subr.mxu0 0.0
        %474 = vmatpush1.msra.mxu0 0.0
        %475 = vmatprep.subr.mxu0 0.0
        %476 = vmatpush1.msra.mxu0 0.0
        %477 = vmatprep.subr.mxu0 0.0
        %478 = vmatpush1.msra.mxu0 0.0
        %479 = vmatprep.subr.mxu0 0.0
        %480 = vmatpush1.msra.mxu0 0.0
        %481 = vmatprep.subr.mxu0 0.0
        %482 = vmatpush1.msra.mxu0 0.0
        %483 = vmatprep.subr.mxu0 0.0
        %484 = vmatpush1.msra.mxu0 0.0
        %485 = vmatprep.subr.mxu0 0.0
        %486 = vmatpush1.msra.mxu0 0.0
        %487 = vmatprep.subr.mxu0 0.0
        %488 = vmatpush1.msra.mxu0 0.0
        %489 = vmatprep.subr.mxu0 0.0
        %490 = vmatpush1.msra.mxu0 0.0
        %491 = vmatprep.subr.mxu0 0.0
        %492 = vmatpush1.msra.mxu0 0.0
        %493 = vmatprep.subr.mxu0 0.0
        %494 = vmatpush1.msra.mxu0 0.0
        %495 = vmatprep.subr.mxu0 0.0
        %496 = vmatpush1.msra.mxu0 0.0
        %497 = vmatprep.subr.mxu0 0.0
        %498 = vmatpush1.msra.mxu0 0.0
        %499 = vmatprep.subr.mxu0 0.0
        %500 = vmatpush1.msra.mxu0 0.0
        %501 = vmatprep.subr.mxu0 0.0
        %502 = vmatpush1.msra.mxu0 0.0
        %503 = vmatprep.subr.mxu0 0.0
        %504 = vmatpush1.msra.mxu0 0.0
        %505 = vmatprep.subr.mxu0 0.0
        %506 = vmatpush1.msra.mxu0 0.0
        %507 = vmatprep.subr.mxu0 0.0
        %508 = vmatpush1.msra.mxu0 0.0
        %509 = vmatprep.subr.mxu0 0.0
        %510 = vmatpush1.msra.mxu0 0.0
        %511 = vmatprep.subr.mxu0 0.0
        %512 = vmatpush1.msra.mxu0 0.0
        %513 = vmatprep.subr.mxu0 0.0
        %514 = vmatpush1.msra.mxu0 0.0
        %515 = vmatprep.mubr.f32.mxu0 0.0
        %516 = vmatmul.mubr.f32.gmra.mrb[0].mxu0 %v443
        %v517 = vpop.f32.mrb[0].mxu0
        %v518 = vadd.f32 %v368, %v517
        %v519 = vpop.f32.mrb[0].mxu0
        %v520 = vadd.f32 %v370, %v519
        %521 = vdwg.mxu0
        %522 = vmatprep.subr.mxu0 0.0
        %523 = vmatpush1.msra.mxu0 %v449
        %524 = vmatprep.subr.mxu0 0.0
        %525 = vmatpush1.msra.mxu0 0.0
        %526 = vmatprep.subr.mxu0 0.0
        %527 = vmatpush1.msra.mxu0 0.0
        %528 = vmatprep.subr.mxu0 0.0
        %529 = vmatpush1.msra.mxu0 0.0
        %530 = vmatprep.subr.mxu0 0.0
        %531 = vmatpush1.msra.mxu0 0.0
        %532 = vmatprep.subr.mxu0 0.0
        %533 = vmatpush1.msra.mxu0 0.0
        %534 = vmatprep.subr.mxu0 0.0
        %535 = vmatpush1.msra.mxu0 0.0
        %536 = vmatprep.subr.mxu0 0.0
        %537 = vmatpush1.msra.mxu0 0.0
        %538 = vmatprep.subr.mxu0 0.0
        %539 = vmatpush1.msra.mxu0 0.0
        %540 = vmatprep.subr.mxu0 0.0
        %541 = vmatpush1.msra.mxu0 0.0
        %542 = vmatprep.subr.mxu0 0.0
        %543 = vmatpush1.msra.mxu0 0.0
        %544 = vmatprep.subr.mxu0 0.0
        %545 = vmatpush1.msra.mxu0 0.0
        %546 = vmatprep.subr.mxu0 0.0
        %547 = vmatpush1.msra.mxu0 0.0
        %548 = vmatprep.subr.mxu0 0.0
        %549 = vmatpush1.msra.mxu0 0.0
        %550 = vmatprep.subr.mxu0 0.0
        %551 = vmatpush1.msra.mxu0 0.0
        %552 = vmatprep.subr.mxu0 0.0
        %553 = vmatpush1.msra.mxu0 0.0
        %554 = vmatprep.subr.mxu0 0.0
        %555 = vmatpush1.msra.mxu0 0.0
        %556 = vmatprep.subr.mxu0 0.0
        %557 = vmatpush1.msra.mxu0 0.0
        %558 = vmatprep.subr.mxu0 0.0
        %559 = vmatpush1.msra.mxu0 0.0
        %560 = vmatprep.subr.mxu0 0.0
        %561 = vmatpush1.msra.mxu0 0.0
        %562 = vmatprep.subr.mxu0 0.0
        %563 = vmatpush1.msra.mxu0 0.0
        %564 = vmatprep.subr.mxu0 0.0
        %565 = vmatpush1.msra.mxu0 0.0
        %566 = vmatprep.subr.mxu0 0.0
        %567 = vmatpush1.msra.mxu0 0.0
        %568 = vmatprep.subr.mxu0 0.0
        %569 = vmatpush1.msra.mxu0 0.0
        %570 = vmatprep.subr.mxu0 0.0
        %571 = vmatpush1.msra.mxu0 0.0
        %572 = vmatprep.subr.mxu0 0.0
        %573 = vmatpush1.msra.mxu0 0.0
        %574 = vmatprep.subr.mxu0 0.0
        %575 = vmatpush1.msra.mxu0 0.0
        %576 = vmatprep.subr.mxu0 0.0
        %577 = vmatpush1.msra.mxu0 0.0
        %578 = vmatprep.subr.mxu0 0.0
        %579 = vmatpush1.msra.mxu0 0.0
        %580 = vmatprep.subr.mxu0 0.0
        %581 = vmatpush1.msra.mxu0 0.0
        %582 = vmatprep.subr.mxu0 0.0
        %583 = vmatpush1.msra.mxu0 0.0
        %584 = vmatprep.subr.mxu0 0.0
        %585 = vmatpush1.msra.mxu0 0.0
        %586 = vmatprep.mubr.f32.mxu0 0.0
        %587 = vmatmul.mubr.f32.gmra.mrb[0].mxu0 %v443
        %v588 = vpop.f32.mrb[0].mxu0
        %v589 = vadd.f32 %v439, %v588
        %v590 = vpop.f32.mrb[0].mxu0
        %591 = vdwg.mxu0
        %s592 = scalar_lea.vmem %s1, 8
        %v593 = vld [vmem:[%s592] sm:$0xf]
        %594 = vrot.lane.b32.xlu0 %v273, 88
        %v595 = vpop.permute.xlu0 %594
        %596 = vrot.lane.b32.xlu0 %v280, 88
        %v597 = vpop.permute.xlu0 %596
        %598 = vrot.lane.b32.xlu0 %v274, 88
        %v599 = vpop.permute.xlu0 %598
        %vm600 = vcmask 719872
        %v601 = vsel %vm600, %v595, %v597
        %v602 = vsel %vm600, %v597, %v599
        %v604 = vsel %vm290, %v593, 0
        %v606 = vsel %vm294, %v601, 0
        %v608 = vsel %vm294, %v602, 0
        %v610 = vsel %vm294, %v599, 0
        %612 = vmatprep.subr.mxu0 %v608
        %613 = vmatpush1.msra.mxu0 %v606
        %614 = vmatprep.subr.mxu0 0.0
        %615 = vmatpush1.msra.mxu0 0.0
        %616 = vmatprep.subr.mxu0 0.0
        %617 = vmatpush1.msra.mxu0 0.0
        %618 = vmatprep.subr.mxu0 0.0
        %619 = vmatpush1.msra.mxu0 0.0
        %620 = vmatprep.subr.mxu0 0.0
        %621 = vmatpush1.msra.mxu0 0.0
        %622 = vmatprep.subr.mxu0 0.0
        %623 = vmatpush1.msra.mxu0 0.0
        %624 = vmatprep.subr.mxu0 0.0
        %625 = vmatpush1.msra.mxu0 0.0
        %626 = vmatprep.subr.mxu0 0.0
        %627 = vmatpush1.msra.mxu0 0.0
        %628 = vmatprep.subr.mxu0 0.0
        %629 = vmatpush1.msra.mxu0 0.0
        %630 = vmatprep.subr.mxu0 0.0
        %631 = vmatpush1.msra.mxu0 0.0
        %632 = vmatprep.subr.mxu0 0.0
        %633 = vmatpush1.msra.mxu0 0.0
        %634 = vmatprep.subr.mxu0 0.0
        %635 = vmatpush1.msra.mxu0 0.0
        %636 = vmatprep.subr.mxu0 0.0
        %637 = vmatpush1.msra.mxu0 0.0
        %638 = vmatprep.subr.mxu0 0.0
        %639 = vmatpush1.msra.mxu0 0.0
        %640 = vmatprep.subr.mxu0 0.0
        %641 = vmatpush1.msra.mxu0 0.0
        %642 = vmatprep.subr.mxu0 0.0
        %643 = vmatpush1.msra.mxu0 0.0
        %644 = vmatprep.subr.mxu0 0.0
        %645 = vmatpush1.msra.mxu0 0.0
        %646 = vmatprep.subr.mxu0 0.0
        %647 = vmatpush1.msra.mxu0 0.0
        %648 = vmatprep.subr.mxu0 0.0
        %649 = vmatpush1.msra.mxu0 0.0
        %650 = vmatprep.subr.mxu0 0.0
        %651 = vmatpush1.msra.mxu0 0.0
        %652 = vmatprep.subr.mxu0 0.0
        %653 = vmatpush1.msra.mxu0 0.0
        %654 = vmatprep.subr.mxu0 0.0
        %655 = vmatpush1.msra.mxu0 0.0
        %656 = vmatprep.subr.mxu0 0.0
        %657 = vmatpush1.msra.mxu0 0.0
        %658 = vmatprep.subr.mxu0 0.0
        %659 = vmatpush1.msra.mxu0 0.0
        %660 = vmatprep.subr.mxu0 0.0
        %661 = vmatpush1.msra.mxu0 0.0
        %662 = vmatprep.subr.mxu0 0.0
        %663 = vmatpush1.msra.mxu0 0.0
        %664 = vmatprep.subr.mxu0 0.0
        %665 = vmatpush1.msra.mxu0 0.0
        %666 = vmatprep.subr.mxu0 0.0
        %667 = vmatpush1.msra.mxu0 0.0
        %668 = vmatprep.subr.mxu0 0.0
        %669 = vmatpush1.msra.mxu0 0.0
        %670 = vmatprep.subr.mxu0 0.0
        %671 = vmatpush1.msra.mxu0 0.0
        %672 = vmatprep.subr.mxu0 0.0
        %673 = vmatpush1.msra.mxu0 0.0
        %674 = vmatprep.subr.mxu0 0.0
        %675 = vmatpush1.msra.mxu0 0.0
        %676 = vmatprep.mubr.f32.mxu0 0.0
        %677 = vmatmul.mubr.f32.gmra.mrb[0].mxu0 %v604
        %v678 = vpop.f32.mrb[0].mxu0
        %v679 = vadd.f32 0.0, %v678
        %v680 = vpop.f32.mrb[0].mxu0
        %v681 = vadd.f32 0.0, %v680
        %682 = vdwg.mxu0
        %683 = vmatprep.subr.mxu0 0.0
        %684 = vmatpush1.msra.mxu0 %v610
        %685 = vmatprep.subr.mxu0 0.0
        %686 = vmatpush1.msra.mxu0 0.0
        %687 = vmatprep.subr.mxu0 0.0
        %688 = vmatpush1.msra.mxu0 0.0
        %689 = vmatprep.subr.mxu0 0.0
        %690 = vmatpush1.msra.mxu0 0.0
        %691 = vmatprep.subr.mxu0 0.0
        %692 = vmatpush1.msra.mxu0 0.0
        %693 = vmatprep.subr.mxu0 0.0
        %694 = vmatpush1.msra.mxu0 0.0
        %695 = vmatprep.subr.mxu0 0.0
        %696 = vmatpush1.msra.mxu0 0.0
        %697 = vmatprep.subr.mxu0 0.0
        %698 = vmatpush1.msra.mxu0 0.0
        %699 = vmatprep.subr.mxu0 0.0
        %700 = vmatpush1.msra.mxu0 0.0
        %701 = vmatprep.subr.mxu0 0.0
        %702 = vmatpush1.msra.mxu0 0.0
        %703 = vmatprep.subr.mxu0 0.0
        %704 = vmatpush1.msra.mxu0 0.0
        %705 = vmatprep.subr.mxu0 0.0
        %706 = vmatpush1.msra.mxu0 0.0
        %707 = vmatprep.subr.mxu0 0.0
        %708 = vmatpush1.msra.mxu0 0.0
        %709 = vmatprep.subr.mxu0 0.0
        %710 = vmatpush1.msra.mxu0 0.0
        %711 = vmatprep.subr.mxu0 0.0
        %712 = vmatpush1.msra.mxu0 0.0
        %713 = vmatprep.subr.mxu0 0.0
        %714 = vmatpush1.msra.mxu0 0.0
        %715 = vmatprep.subr.mxu0 0.0
        %716 = vmatpush1.msra.mxu0 0.0
        %717 = vmatprep.subr.mxu0 0.0
        %718 = vmatpush1.msra.mxu0 0.0
        %719 = vmatprep.subr.mxu0 0.0
        %720 = vmatpush1.msra.mxu0 0.0
        %721 = vmatprep.subr.mxu0 0.0
        %722 = vmatpush1.msra.mxu0 0.0
        %723 = vmatprep.subr.mxu0 0.0
        %724 = vmatpush1.msra.mxu0 0.0
        %725 = vmatprep.subr.mxu0 0.0
        %726 = vmatpush1.msra.mxu0 0.0
        %727 = vmatprep.subr.mxu0 0.0
        %728 = vmatpush1.msra.mxu0 0.0
        %729 = vmatprep.subr.mxu0 0.0
        %730 = vmatpush1.msra.mxu0 0.0
        %731 = vmatprep.subr.mxu0 0.0
        %732 = vmatpush1.msra.mxu0 0.0
        %733 = vmatprep.subr.mxu0 0.0
        %734 = vmatpush1.msra.mxu0 0.0
        %735 = vmatprep.subr.mxu0 0.0
        %736 = vmatpush1.msra.mxu0 0.0
        %737 = vmatprep.subr.mxu0 0.0
        %738 = vmatpush1.msra.mxu0 0.0
        %739 = vmatprep.subr.mxu0 0.0
        %740 = vmatpush1.msra.mxu0 0.0
        %741 = vmatprep.subr.mxu0 0.0
        %742 = vmatpush1.msra.mxu0 0.0
        %743 = vmatprep.subr.mxu0 0.0
        %744 = vmatpush1.msra.mxu0 0.0
        %745 = vmatprep.subr.mxu0 0.0
        %746 = vmatpush1.msra.mxu0 0.0
        %747 = vmatprep.mubr.f32.mxu0 0.0
        %748 = vmatmul.mubr.f32.gmra.mrb[0].mxu0 %v604
        %v749 = vpop.f32.mrb[0].mxu0
        %v750 = vadd.f32 0.0, %v749
        %v751 = vpop.f32.mrb[0].mxu0
        %752 = vdwg.mxu0
        %v753 = vadd.f32 %v518, %v679
        %v754 = vadd.f32 %v520, %v681
        %v755 = vadd.f32 %v589, %v750
        %756 = vst [vmem:[#allocation2] sm:$0xff] 0.0
        %vm757 = vcmask 863232
        %758 = vst.msk [vmem:[#allocation2 + $0x8] sm:$0xf] %vm757, 0.0
        %v762 = vcombine.low %v753, %v754
        %763 = vrot.lane.b32.xlu0 %v762, 20
        %v764 = vpop.permute.xlu0 %763
        %765 = vrot.lane.b32.xlu0 %v755, 20
        %v766 = vpop.permute.xlu0 %765
        %v767 = vrot.slane %v764, 4
        %vm768 = vcmask 162816
        %v769 = vsel %vm768, %v767, %v764
        %v770 = vsel %vm768, %v767, %v766
        %vm773 = vcmask 1043616
        %vm774 = vcmask 1047556
        %vm775 = vmor %vm774, %vm773
        %776 = vst.msk [vmem:[#allocation2] sm:$0xff] %vm775, %v769
        %vm777 = vcmask 683008
        %778 = vst.msk [vmem:[#allocation2 + $0x8] sm:$0xf] %vm777, %v770
        %v779 = vld [vmem:[#allocation2] sm:$0xff]
        %v780 = vld [vmem:[#allocation2 + $0x8] sm:$0xf]
        %v781 = vld [vmem:[%s2] sm:$0xff]
        %s782 = scalar_lea.vmem %s2, 8
        %v783 = vld [vmem:[%s782] sm:$0xff]
        %v786 = vcombine.high %v779, %v779
        %787 = vrot.lane.b32.xlu0 %v779, 127
        %v788 = vpop.permute.xlu0 %787
        %789 = vrot.lane.b32.xlu0 %v786, 127
        %v790 = vpop.permute.xlu0 %789
        %791 = vrot.lane.b32.xlu0 %v780, 127
        %v792 = vpop.permute.xlu0 %791
        %vm793 = vcmask 1039360
        %v794 = vsel %vm793, %v788, %v790
        %v795 = vsel %vm793, %v790, %v792
        %v797 = vsel %vm290, %v783, 0
        %v799 = vsel %vm294, %v794, 0
        %v801 = vsel %vm294, %v795, 0
        %v803 = vsel %vm294, %v792, 0
        %805 = vmatprep.subr.mxu0 %v801
        %806 = vmatpush1.msra.mxu0 %v799
        %807 = vmatprep.subr.mxu0 0.0
        %808 = vmatpush1.msra.mxu0 0.0
        %809 = vmatprep.subr.mxu0 0.0
        %810 = vmatpush1.msra.mxu0 0.0
        %811 = vmatprep.subr.mxu0 0.0
        %812 = vmatpush1.msra.mxu0 0.0
        %813 = vmatprep.subr.mxu0 0.0
        %814 = vmatpush1.msra.mxu0 0.0
        %815 = vmatprep.subr.mxu0 0.0
        %816 = vmatpush1.msra.mxu0 0.0
        %817 = vmatprep.subr.mxu0 0.0
        %818 = vmatpush1.msra.mxu0 0.0
        %819 = vmatprep.subr.mxu0 0.0
        %820 = vmatpush1.msra.mxu0 0.0
        %821 = vmatprep.subr.mxu0 0.0
        %822 = vmatpush1.msra.mxu0 0.0
        %823 = vmatprep.subr.mxu0 0.0
        %824 = vmatpush1.msra.mxu0 0.0
        %825 = vmatprep.subr.mxu0 0.0
        %826 = vmatpush1.msra.mxu0 0.0
        %827 = vmatprep.subr.mxu0 0.0
        %828 = vmatpush1.msra.mxu0 0.0
        %829 = vmatprep.subr.mxu0 0.0
        %830 = vmatpush1.msra.mxu0 0.0
        %831 = vmatprep.subr.mxu0 0.0
        %832 = vmatpush1.msra.mxu0 0.0
        %833 = vmatprep.subr.mxu0 0.0
        %834 = vmatpush1.msra.mxu0 0.0
        %835 = vmatprep.subr.mxu0 0.0
        %836 = vmatpush1.msra.mxu0 0.0
        %837 = vmatprep.subr.mxu0 0.0
        %838 = vmatpush1.msra.mxu0 0.0
        %839 = vmatprep.subr.mxu0 0.0
        %840 = vmatpush1.msra.mxu0 0.0
        %841 = vmatprep.subr.mxu0 0.0
        %842 = vmatpush1.msra.mxu0 0.0
        %843 = vmatprep.subr.mxu0 0.0
        %844 = vmatpush1.msra.mxu0 0.0
        %845 = vmatprep.subr.mxu0 0.0
        %846 = vmatpush1.msra.mxu0 0.0
        %847 = vmatprep.subr.mxu0 0.0
        %848 = vmatpush1.msra.mxu0 0.0
        %849 = vmatprep.subr.mxu0 0.0
        %850 = vmatpush1.msra.mxu0 0.0
        %851 = vmatprep.subr.mxu0 0.0
        %852 = vmatpush1.msra.mxu0 0.0
        %853 = vmatprep.subr.mxu0 0.0
        %854 = vmatpush1.msra.mxu0 0.0
        %855 = vmatprep.subr.mxu0 0.0
        %856 = vmatpush1.msra.mxu0 0.0
        %857 = vmatprep.subr.mxu0 0.0
        %858 = vmatpush1.msra.mxu0 0.0
        %859 = vmatprep.subr.mxu0 0.0
        %860 = vmatpush1.msra.mxu0 0.0
        %861 = vmatprep.subr.mxu0 0.0
        %862 = vmatpush1.msra.mxu0 0.0
        %863 = vmatprep.subr.mxu0 0.0
        %864 = vmatpush1.msra.mxu0 0.0
        %865 = vmatprep.subr.mxu0 0.0
        %866 = vmatpush1.msra.mxu0 0.0
        %867 = vmatprep.subr.mxu0 0.0
        %868 = vmatpush1.msra.mxu0 0.0
        %869 = vmatprep.mubr.f32.mxu0 0.0
        %870 = vmatmul.mubr.f32.gmra.mrb[0].mxu0 %v797
        %v871 = vpop.f32.mrb[0].mxu0
        %v872 = vadd.f32 0.0, %v871
        %v873 = vpop.f32.mrb[0].mxu0
        %v874 = vadd.f32 0.0, %v873
        %875 = vdwg.mxu0
        %876 = vmatprep.subr.mxu0 0.0
        %877 = vmatpush1.msra.mxu0 %v803
        %878 = vmatprep.subr.mxu0 0.0
        %879 = vmatpush1.msra.mxu0 0.0
        %880 = vmatprep.subr.mxu0 0.0
        %881 = vmatpush1.msra.mxu0 0.0
        %882 = vmatprep.subr.mxu0 0.0
        %883 = vmatpush1.msra.mxu0 0.0
        %884 = vmatprep.subr.mxu0 0.0
        %885 = vmatpush1.msra.mxu0 0.0
        %886 = vmatprep.subr.mxu0 0.0
        %887 = vmatpush1.msra.mxu0 0.0
        %888 = vmatprep.subr.mxu0 0.0
        %889 = vmatpush1.msra.mxu0 0.0
        %890 = vmatprep.subr.mxu0 0.0
        %891 = vmatpush1.msra.mxu0 0.0
        %892 = vmatprep.subr.mxu0 0.0
        %893 = vmatpush1.msra.mxu0 0.0
        %894 = vmatprep.subr.mxu0 0.0
        %895 = vmatpush1.msra.mxu0 0.0
        %896 = vmatprep.subr.mxu0 0.0
        %897 = vmatpush1.msra.mxu0 0.0
        %898 = vmatprep.subr.mxu0 0.0
        %899 = vmatpush1.msra.mxu0 0.0
        %900 = vmatprep.subr.mxu0 0.0
        %901 = vmatpush1.msra.mxu0 0.0
        %902 = vmatprep.subr.mxu0 0.0
        %903 = vmatpush1.msra.mxu0 0.0
        %904 = vmatprep.subr.mxu0 0.0
        %905 = vmatpush1.msra.mxu0 0.0
        %906 = vmatprep.subr.mxu0 0.0
        %907 = vmatpush1.msra.mxu0 0.0
        %908 = vmatprep.subr.mxu0 0.0
        %909 = vmatpush1.msra.mxu0 0.0
        %910 = vmatprep.subr.mxu0 0.0
        %911 = vmatpush1.msra.mxu0 0.0
        %912 = vmatprep.subr.mxu0 0.0
        %913 = vmatpush1.msra.mxu0 0.0
        %914 = vmatprep.subr.mxu0 0.0
        %915 = vmatpush1.msra.mxu0 0.0
        %916 = vmatprep.subr.mxu0 0.0
        %917 = vmatpush1.msra.mxu0 0.0
        %918 = vmatprep.subr.mxu0 0.0
        %919 = vmatpush1.msra.mxu0 0.0
        %920 = vmatprep.subr.mxu0 0.0
        %921 = vmatpush1.msra.mxu0 0.0
        %922 = vmatprep.subr.mxu0 0.0
        %923 = vmatpush1.msra.mxu0 0.0
        %924 = vmatprep.subr.mxu0 0.0
        %925 = vmatpush1.msra.mxu0 0.0
        %926 = vmatprep.subr.mxu0 0.0
        %927 = vmatpush1.msra.mxu0 0.0
        %928 = vmatprep.subr.mxu0 0.0
        %929 = vmatpush1.msra.mxu0 0.0
        %930 = vmatprep.subr.mxu0 0.0
        %931 = vmatpush1.msra.mxu0 0.0
        %932 = vmatprep.subr.mxu0 0.0
        %933 = vmatpush1.msra.mxu0 0.0
        %934 = vmatprep.subr.mxu0 0.0
        %935 = vmatpush1.msra.mxu0 0.0
        %936 = vmatprep.subr.mxu0 0.0
        %937 = vmatpush1.msra.mxu0 0.0
        %938 = vmatprep.subr.mxu0 0.0
        %939 = vmatpush1.msra.mxu0 0.0
        %940 = vmatprep.mubr.f32.mxu0 0.0
        %941 = vmatmul.mubr.f32.gmra.mrb[0].mxu0 %v797
        %v942 = vpop.f32.mrb[0].mxu0
        %v943 = vadd.f32 0.0, %v942
        %v944 = vpop.f32.mrb[0].mxu0
        %945 = vdwg.mxu0
        %v947 = vsel %vm290, %v781, 0
        %v949 = vsel %vm294, %v779, 0
        %v951 = vsel %vm294, %v786, 0
        %v953 = vsel %vm294, %v780, 0
        %955 = vmatprep.subr.mxu0 %v951
        %956 = vmatpush1.msra.mxu0 %v949
        %957 = vmatprep.subr.mxu0 0.0
        %958 = vmatpush1.msra.mxu0 0.0
        %959 = vmatprep.subr.mxu0 0.0
        %960 = vmatpush1.msra.mxu0 0.0
        %961 = vmatprep.subr.mxu0 0.0
        %962 = vmatpush1.msra.mxu0 0.0
        %963 = vmatprep.subr.mxu0 0.0
        %964 = vmatpush1.msra.mxu0 0.0
        %965 = vmatprep.subr.mxu0 0.0
        %966 = vmatpush1.msra.mxu0 0.0
        %967 = vmatprep.subr.mxu0 0.0
        %968 = vmatpush1.msra.mxu0 0.0
        %969 = vmatprep.subr.mxu0 0.0
        %970 = vmatpush1.msra.mxu0 0.0
        %971 = vmatprep.subr.mxu0 0.0
        %972 = vmatpush1.msra.mxu0 0.0
        %973 = vmatprep.subr.mxu0 0.0
        %974 = vmatpush1.msra.mxu0 0.0
        %975 = vmatprep.subr.mxu0 0.0
        %976 = vmatpush1.msra.mxu0 0.0
        %977 = vmatprep.subr.mxu0 0.0
        %978 = vmatpush1.msra.mxu0 0.0
        %979 = vmatprep.subr.mxu0 0.0
        %980 = vmatpush1.msra.mxu0 0.0
        %981 = vmatprep.subr.mxu0 0.0
        %982 = vmatpush1.msra.mxu0 0.0
        %983 = vmatprep.subr.mxu0 0.0
        %984 = vmatpush1.msra.mxu0 0.0
        %985 = vmatprep.subr.mxu0 0.0
        %986 = vmatpush1.msra.mxu0 0.0
        %987 = vmatprep.subr.mxu0 0.0
        %988 = vmatpush1.msra.mxu0 0.0
        %989 = vmatprep.subr.mxu0 0.0
        %990 = vmatpush1.msra.mxu0 0.0
        %991 = vmatprep.subr.mxu0 0.0
        %992 = vmatpush1.msra.mxu0 0.0
        %993 = vmatprep.subr.mxu0 0.0
        %994 = vmatpush1.msra.mxu0 0.0
        %995 = vmatprep.subr.mxu0 0.0
        %996 = vmatpush1.msra.mxu0 0.0
        %997 = vmatprep.subr.mxu0 0.0
        %998 = vmatpush1.msra.mxu0 0.0
        %999 = vmatprep.subr.mxu0 0.0
        %1000 = vmatpush1.msra.mxu0 0.0
        %1001 = vmatprep.subr.mxu0 0.0
        %1002 = vmatpush1.msra.mxu0 0.0
        %1003 = vmatprep.subr.mxu0 0.0
        %1004 = vmatpush1.msra.mxu0 0.0
        %1005 = vmatprep.subr.mxu0 0.0
        %1006 = vmatpush1.msra.mxu0 0.0
        %1007 = vmatprep.subr.mxu0 0.0
        %1008 = vmatpush1.msra.mxu0 0.0
        %1009 = vmatprep.subr.mxu0 0.0
        %1010 = vmatpush1.msra.mxu0 0.0
        %1011 = vmatprep.subr.mxu0 0.0
        %1012 = vmatpush1.msra.mxu0 0.0
        %1013 = vmatprep.subr.mxu0 0.0
        %1014 = vmatpush1.msra.mxu0 0.0
        %1015 = vmatprep.subr.mxu0 0.0
        %1016 = vmatpush1.msra.mxu0 0.0
        %1017 = vmatprep.subr.mxu0 0.0
        %1018 = vmatpush1.msra.mxu0 0.0
        %1019 = vmatprep.mubr.f32.mxu0 0.0
        %1020 = vmatmul.mubr.f32.gmra.mrb[0].mxu0 %v947
        %v1021 = vpop.f32.mrb[0].mxu0
        %v1022 = vadd.f32 %v872, %v1021
        %v1023 = vpop.f32.mrb[0].mxu0
        %v1024 = vadd.f32 %v874, %v1023
        %1025 = vdwg.mxu0
        %1026 = vmatprep.subr.mxu0 0.0
        %1027 = vmatpush1.msra.mxu0 %v953
        %1028 = vmatprep.subr.mxu0 0.0
        %1029 = vmatpush1.msra.mxu0 0.0
        %1030 = vmatprep.subr.mxu0 0.0
        %1031 = vmatpush1.msra.mxu0 0.0
        %1032 = vmatprep.subr.mxu0 0.0
        %1033 = vmatpush1.msra.mxu0 0.0
        %1034 = vmatprep.subr.mxu0 0.0
        %1035 = vmatpush1.msra.mxu0 0.0
        %1036 = vmatprep.subr.mxu0 0.0
        %1037 = vmatpush1.msra.mxu0 0.0
        %1038 = vmatprep.subr.mxu0 0.0
        %1039 = vmatpush1.msra.mxu0 0.0
        %1040 = vmatprep.subr.mxu0 0.0
        %1041 = vmatpush1.msra.mxu0 0.0
        %1042 = vmatprep.subr.mxu0 0.0
        %1043 = vmatpush1.msra.mxu0 0.0
        %1044 = vmatprep.subr.mxu0 0.0
        %1045 = vmatpush1.msra.mxu0 0.0
        %1046 = vmatprep.subr.mxu0 0.0
        %1047 = vmatpush1.msra.mxu0 0.0
        %1048 = vmatprep.subr.mxu0 0.0
        %1049 = vmatpush1.msra.mxu0 0.0
        %1050 = vmatprep.subr.mxu0 0.0
        %1051 = vmatpush1.msra.mxu0 0.0
        %1052 = vmatprep.subr.mxu0 0.0
        %1053 = vmatpush1.msra.mxu0 0.0
        %1054 = vmatprep.subr.mxu0 0.0
        %1055 = vmatpush1.msra.mxu0 0.0
        %1056 = vmatprep.subr.mxu0 0.0
        %1057 = vmatpush1.msra.mxu0 0.0
        %1058 = vmatprep.subr.mxu0 0.0
        %1059 = vmatpush1.msra.mxu0 0.0
        %1060 = vmatprep.subr.mxu0 0.0
        %1061 = vmatpush1.msra.mxu0 0.0
        %1062 = vmatprep.subr.mxu0 0.0
        %1063 = vmatpush1.msra.mxu0 0.0
        %1064 = vmatprep.subr.mxu0 0.0
        %1065 = vmatpush1.msra.mxu0 0.0
        %1066 = vmatprep.subr.mxu0 0.0
        %1067 = vmatpush1.msra.mxu0 0.0
        %1068 = vmatprep.subr.mxu0 0.0
        %1069 = vmatpush1.msra.mxu0 0.0
        %1070 = vmatprep.subr.mxu0 0.0
        %1071 = vmatpush1.msra.mxu0 0.0
        %1072 = vmatprep.subr.mxu0 0.0
        %1073 = vmatpush1.msra.mxu0 0.0
        %1074 = vmatprep.subr.mxu0 0.0
        %1075 = vmatpush1.msra.mxu0 0.0
        %1076 = vmatprep.subr.mxu0 0.0
        %1077 = vmatpush1.msra.mxu0 0.0
        %1078 = vmatprep.subr.mxu0 0.0
        %1079 = vmatpush1.msra.mxu0 0.0
        %1080 = vmatprep.subr.mxu0 0.0
        %1081 = vmatpush1.msra.mxu0 0.0
        %1082 = vmatprep.subr.mxu0 0.0
        %1083 = vmatpush1.msra.mxu0 0.0
        %1084 = vmatprep.subr.mxu0 0.0
        %1085 = vmatpush1.msra.mxu0 0.0
        %1086 = vmatprep.subr.mxu0 0.0
        %1087 = vmatpush1.msra.mxu0 0.0
        %1088 = vmatprep.subr.mxu0 0.0
        %1089 = vmatpush1.msra.mxu0 0.0
        %1090 = vmatprep.mubr.f32.mxu0 0.0
        %1091 = vmatmul.mubr.f32.gmra.mrb[0].mxu0 %v947
        %v1092 = vpop.f32.mrb[0].mxu0
        %v1093 = vadd.f32 %v943, %v1092
        %v1094 = vpop.f32.mrb[0].mxu0
        %1095 = vdwg.mxu0
        %s1096 = scalar_lea.vmem %s2, 16
        %v1097 = vld [vmem:[%s1096] sm:$0xff]
        %1098 = vrot.lane.b32.xlu0 %v779, 126
        %v1099 = vpop.permute.xlu0 %1098
        %1100 = vrot.lane.b32.xlu0 %v786, 126
        %v1101 = vpop.permute.xlu0 %1100
        %1102 = vrot.lane.b32.xlu0 %v780, 126
        %v1103 = vpop.permute.xlu0 %1102
        %vm1104 = vcmask 1031168
        %v1105 = vsel %vm1104, %v1099, %v1101
        %v1106 = vsel %vm1104, %v1101, %v1103
        %v1108 = vsel %vm290, %v1097, 0
        %v1110 = vsel %vm294, %v1105, 0
        %v1112 = vsel %vm294, %v1106, 0
        %v1114 = vsel %vm294, %v1103, 0
        %1116 = vmatprep.subr.mxu0 %v1112
        %1117 = vmatpush1.msra.mxu0 %v1110
        %1118 = vmatprep.subr.mxu0 0.0
        %1119 = vmatpush1.msra.mxu0 0.0
        %1120 = vmatprep.subr.mxu0 0.0
        %1121 = vmatpush1.msra.mxu0 0.0
        %1122 = vmatprep.subr.mxu0 0.0
        %1123 = vmatpush1.msra.mxu0 0.0
        %1124 = vmatprep.subr.mxu0 0.0
        %1125 = vmatpush1.msra.mxu0 0.0
        %1126 = vmatprep.subr.mxu0 0.0
        %1127 = vmatpush1.msra.mxu0 0.0
        %1128 = vmatprep.subr.mxu0 0.0
        %1129 = vmatpush1.msra.mxu0 0.0
        %1130 = vmatprep.subr.mxu0 0.0
        %1131 = vmatpush1.msra.mxu0 0.0
        %1132 = vmatprep.subr.mxu0 0.0
        %1133 = vmatpush1.msra.mxu0 0.0
        %1134 = vmatprep.subr.mxu0 0.0
        %1135 = vmatpush1.msra.mxu0 0.0
        %1136 = vmatprep.subr.mxu0 0.0
        %1137 = vmatpush1.msra.mxu0 0.0
        %1138 = vmatprep.subr.mxu0 0.0
        %1139 = vmatpush1.msra.mxu0 0.0
        %1140 = vmatprep.subr.mxu0 0.0
        %1141 = vmatpush1.msra.mxu0 0.0
        %1142 = vmatprep.subr.mxu0 0.0
        %1143 = vmatpush1.msra.mxu0 0.0
        %1144 = vmatprep.subr.mxu0 0.0
        %1145 = vmatpush1.msra.mxu0 0.0
        %1146 = vmatprep.subr.mxu0 0.0
        %1147 = vmatpush1.msra.mxu0 0.0
        %1148 = vmatprep.subr.mxu0 0.0
        %1149 = vmatpush1.msra.mxu0 0.0
        %1150 = vmatprep.subr.mxu0 0.0
        %1151 = vmatpush1.msra.mxu0 0.0
        %1152 = vmatprep.subr.mxu0 0.0
        %1153 = vmatpush1.msra.mxu0 0.0
        %1154 = vmatprep.subr.mxu0 0.0
        %1155 = vmatpush1.msra.mxu0 0.0
        %1156 = vmatprep.subr.mxu0 0.0
        %1157 = vmatpush1.msra.mxu0 0.0
        %1158 = vmatprep.subr.mxu0 0.0
        %1159 = vmatpush1.msra.mxu0 0.0
        %1160 = vmatprep.subr.mxu0 0.0
        %1161 = vmatpush1.msra.mxu0 0.0
        %1162 = vmatprep.subr.mxu0 0.0
        %1163 = vmatpush1.msra.mxu0 0.0
        %1164 = vmatprep.subr.mxu0 0.0
        %1165 = vmatpush1.msra.mxu0 0.0
        %1166 = vmatprep.subr.mxu0 0.0
        %1167 = vmatpush1.msra.mxu0 0.0
        %1168 = vmatprep.subr.mxu0 0.0
        %1169 = vmatpush1.msra.mxu0 0.0
        %1170 = vmatprep.subr.mxu0 0.0
        %1171 = vmatpush1.msra.mxu0 0.0
        %1172 = vmatprep.subr.mxu0 0.0
        %1173 = vmatpush1.msra.mxu0 0.0
        %1174 = vmatprep.subr.mxu0 0.0
        %1175 = vmatpush1.msra.mxu0 0.0
        %1176 = vmatprep.subr.mxu0 0.0
        %1177 = vmatpush1.msra.mxu0 0.0
        %1178 = vmatprep.subr.mxu0 0.0
        %1179 = vmatpush1.msra.mxu0 0.0
        %1180 = vmatprep.mubr.f32.mxu0 0.0
        %1181 = vmatmul.mubr.f32.gmra.mrb[0].mxu0 %v1108
        %v1182 = vpop.f32.mrb[0].mxu0
        %v1183 = vadd.f32 0.0, %v1182
        %v1184 = vpop.f32.mrb[0].mxu0
        %v1185 = vadd.f32 0.0, %v1184
        %1186 = vdwg.mxu0
        %1187 = vmatprep.subr.mxu0 0.0
        %1188 = vmatpush1.msra.mxu0 %v1114
        %1189 = vmatprep.subr.mxu0 0.0
        %1190 = vmatpush1.msra.mxu0 0.0
        %1191 = vmatprep.subr.mxu0 0.0
        %1192 = vmatpush1.msra.mxu0 0.0
        %1193 = vmatprep.subr.mxu0 0.0
        %1194 = vmatpush1.msra.mxu0 0.0
        %1195 = vmatprep.subr.mxu0 0.0
        %1196 = vmatpush1.msra.mxu0 0.0
        %1197 = vmatprep.subr.mxu0 0.0
        %1198 = vmatpush1.msra.mxu0 0.0
        %1199 = vmatprep.subr.mxu0 0.0
        %1200 = vmatpush1.msra.mxu0 0.0
        %1201 = vmatprep.subr.mxu0 0.0
        %1202 = vmatpush1.msra.mxu0 0.0
        %1203 = vmatprep.subr.mxu0 0.0
        %1204 = vmatpush1.msra.mxu0 0.0
        %1205 = vmatprep.subr.mxu0 0.0
        %1206 = vmatpush1.msra.mxu0 0.0
        %1207 = vmatprep.subr.mxu0 0.0
        %1208 = vmatpush1.msra.mxu0 0.0
        %1209 = vmatprep.subr.mxu0 0.0
        %1210 = vmatpush1.msra.mxu0 0.0
        %1211 = vmatprep.subr.mxu0 0.0
        %1212 = vmatpush1.msra.mxu0 0.0
        %1213 = vmatprep.subr.mxu0 0.0
        %1214 = vmatpush1.msra.mxu0 0.0
        %1215 = vmatprep.subr.mxu0 0.0
        %1216 = vmatpush1.msra.mxu0 0.0
        %1217 = vmatprep.subr.mxu0 0.0
        %1218 = vmatpush1.msra.mxu0 0.0
        %1219 = vmatprep.subr.mxu0 0.0
        %1220 = vmatpush1.msra.mxu0 0.0
        %1221 = vmatprep.subr.mxu0 0.0
        %1222 = vmatpush1.msra.mxu0 0.0
        %1223 = vmatprep.subr.mxu0 0.0
        %1224 = vmatpush1.msra.mxu0 0.0
        %1225 = vmatprep.subr.mxu0 0.0
        %1226 = vmatpush1.msra.mxu0 0.0
        %1227 = vmatprep.subr.mxu0 0.0
        %1228 = vmatpush1.msra.mxu0 0.0
        %1229 = vmatprep.subr.mxu0 0.0
        %1230 = vmatpush1.msra.mxu0 0.0
        %1231 = vmatprep.subr.mxu0 0.0
        %1232 = vmatpush1.msra.mxu0 0.0
        %1233 = vmatprep.subr.mxu0 0.0
        %1234 = vmatpush1.msra.mxu0 0.0
        %1235 = vmatprep.subr.mxu0 0.0
        %1236 = vmatpush1.msra.mxu0 0.0
        %1237 = vmatprep.subr.mxu0 0.0
        %1238 = vmatpush1.msra.mxu0 0.0
        %1239 = vmatprep.subr.mxu0 0.0
        %1240 = vmatpush1.msra.mxu0 0.0
        %1241 = vmatprep.subr.mxu0 0.0
        %1242 = vmatpush1.msra.mxu0 0.0
        %1243 = vmatprep.subr.mxu0 0.0
        %1244 = vmatpush1.msra.mxu0 0.0
        %1245 = vmatprep.subr.mxu0 0.0
        %1246 = vmatpush1.msra.mxu0 0.0
        %1247 = vmatprep.subr.mxu0 0.0
        %1248 = vmatpush1.msra.mxu0 0.0
        %1249 = vmatprep.subr.mxu0 0.0
        %1250 = vmatpush1.msra.mxu0 0.0
        %1251 = vmatprep.mubr.f32.mxu0 0.0
        %1252 = vmatmul.mubr.f32.gmra.mrb[0].mxu0 %v1108
        %v1253 = vpop.f32.mrb[0].mxu0
        %v1254 = vadd.f32 0.0, %v1253
        %v1255 = vpop.f32.mrb[0].mxu0
        %1256 = vdwg.mxu0
        %v1257 = vadd.f32 %v1022, %v1183
        %v1258 = vadd.f32 %v1024, %v1185
        %v1259 = vadd.f32 %v1093, %v1254
        %v1260 = vld [vmem:[%s3] sm:$0x7]
        %v1262 = vlaneseq
        %v1263 = vshrl.u32 %v1262, 7
        %v1264 = vsub.s32 0, %v1263
        %v1265 = vrot.slane %v1260, %v1264
        %v1266 = vlaneseq
        %v1267 = vshrl.u32 %v1266, 7
        %v1268 = vsub.s32 1, %v1267
        %v1269 = vrot.slane %v1260, %v1268
        %v1270 = vlaneseq
        %v1271 = vshrl.u32 %v1270, 7
        %v1272 = vsub.s32 2, %v1271
        %v1273 = vrot.slane %v1260, %v1272
        %v1277 = vmul.f32 %v1257, %v1265
        %v1278 = vmul.f32 %v1258, %v1269
        %v1279 = vmul.f32 %v1259, %v1273
        %1280 = vst [vmem:[%s245] sm:$0xff] %v1277
        %1281 = vst [vmem:[%s245 + $0x8] sm:$0xff] %v1278
        %vm1282 = vcmask 850944
        %1283 = vst.msk [vmem:[%s245 + $0x10] sm:$0xff] %vm1282, %v1279
        %v1284 = vadd.f32 %v1277, %v1278
        %v1285 = vsel %vm1282, %v1279, 0.0
        %v1286 = vadd.f32 %v1284, %v1285
        %1287 = vadd.xlane.f32.xlu0 %v1286
        %v1288 = vpop.xlane.xlu0 %1287
        %vm1289 = vcmask 7168
        %1290 = vst.msk [vmem:[%s266] sm:$0xff] %vm1289, %v1288
        %v1291 = vmul.f32 %v1277, %v1277
        %v1292 = vmul.f32 %v1278, %v1278
        %v1293 = vmul.f32 %v1279, %v1279
        %v1294 = vadd.f32 %v1291, %v1292
        %v1295 = vsel %vm1282, %v1293, 0.0
        %v1296 = vadd.f32 %v1294, %v1295
        %1297 = vadd.xlane.f32.xlu0 %v1296
        %v1298 = vpop.xlane.xlu0 %1297
        %1299 = vst.msk [vmem:[%s270] sm:$0xff] %vm1289, %v1298
        %s1300 = sand.u32 %s118, 1
        %s1301 = scalar_lea.sflag [#allocation4], %s1300
        %s1302 = sand.u32 %s118, 1
        %s1303 = smul.addr %s1302, 24
        %s1304 = scalar_lea.vmem [#allocation3], %s1303
        %p1305 = scmp.lt.s32.totalorder %s21, 1
        %s1306 = scalar_select %p1305, %s21, 1
        %s1307 = smul.addr %s1306, 8
        %s1308 = scalar_lea.vmem %s5, %s1307
        %p1309 = scmp.lt.s32.totalorder %s21, 1
        %s1310 = scalar_select %p1309, %s21, 1
        %s1311 = smul.addr %s1310, 8
        %s1312 = scalar_lea.vmem %s6, %s1311
        // Predicated region
        $region37: #{tpu_custom_call.1} parent=35 // pred_check
          %p1313 = pneg %p128
        $region38: #{tpu_custom_call.1} parent=35 // pred_check_branch
          %1315 = sbr.rel (%p1313) target = $region40
        $region39: #{tpu_custom_call.1} parent=35 // pred_region
          %s1317 = ssub.s32 384, 384
          %1318 = vsyncadd %s1301, %s1317
          %s1319 = smul.addr %s21, 3
          %s1320 = smul.addr %s1319, 128
          %s1321 = scalar_lea.hbm %s4, %s1320
          %s1323 = sshll.u32 %s1304, 4
          %s1324 = int_to_ptr.vmem [resolvable:$true] %s1323
          %1326 = dma.vmem_to_hbm [thread:$0]  %s1324, 384, %s1321, %s1301
        $region40: #{tpu_custom_call.1} parent=35 // pred_fallthru
          _
        // Predicated region
        $region41: #{tpu_custom_call.1} parent=35 // pred_check
          %p1327 = pneg %p154
        $region42: #{tpu_custom_call.1} parent=35 // pred_check_branch
          %1329 = sbr.rel (%p1327) target = $region44
        $region43: #{tpu_custom_call.1} parent=35 // pred_region
          _
        $region44: #{tpu_custom_call.1} parent=35 // pred_fallthru
          _
        // Predicated region
        $region45: #{tpu_custom_call.1} parent=35 // pred_check
          %p1330 = pneg %p180
        $region46: #{tpu_custom_call.1} parent=35 // pred_check_branch
          %1332 = sbr.rel (%p1330) target = $region48
        $region47: #{tpu_custom_call.1} parent=35 // pred_region
          _
        $region48: #{tpu_custom_call.1} parent=35 // pred_fallthru
          _
      $region36: #{tpu_custom_call.1} parent=5 // pred_fallthru
        _
      %p1333 = scmp.le.s32.totalorder 2, %s16
      // Predicated region
      $region49: #{tpu_custom_call.1} parent=5 // pred_check
        %p1334 = pneg %p1333
      $region50: #{tpu_custom_call.1} parent=5 // pred_check_branch
        %1336 = sbr.rel (%p1334) target = $region52
      $region51: #{tpu_custom_call.1} parent=5 // pred_region
        %s1337 = ssub.s32 %s16, 2
        // Predicated region
        $region53: #{tpu_custom_call.1} parent=51 // pred_check
          %p1338 = pneg %p134
        $region54: #{tpu_custom_call.1} parent=51 // pred_check_branch
          %1340 = sbr.rel (%p1338) target = $region56
        $region55: #{tpu_custom_call.1} parent=51 // pred_region
          %s1341 = sand.u32 %s119, 1
          %s1342 = scalar_lea.sflag [#allocation4], %s1341
          %s1343 = sand.u32 %s119, 1
          %s1344 = smul.addr %s1343, 24
          %s1345 = scalar_lea.vmem [#allocation3], %s1344
          %1346 = dma.done %s1342, 384
        $region56: #{tpu_custom_call.1} parent=51 // pred_fallthru
          _
        // Predicated region
        $region57: #{tpu_custom_call.1} parent=51 // pred_check
          %p1347 = pneg %p160
        $region58: #{tpu_custom_call.1} parent=51 // pred_check_branch
          %1349 = sbr.rel (%p1347) target = $region60
        $region59: #{tpu_custom_call.1} parent=51 // pred_region
          %p1350 = scmp.lt.s32.totalorder %s22, 1
          %s1351 = scalar_select %p1350, %s22, 1
          %s1352 = smul.addr %s1351, 8
          %s1353 = scalar_lea.vmem %s5, %s1352
        $region60: #{tpu_custom_call.1} parent=51 // pred_fallthru
          _
        // Predicated region
        $region61: #{tpu_custom_call.1} parent=51 // pred_check
          %p1354 = pneg %p186
        $region62: #{tpu_custom_call.1} parent=51 // pred_check_branch
          %1356 = sbr.rel (%p1354) target = $region64
        $region63: #{tpu_custom_call.1} parent=51 // pred_region
          %p1357 = scmp.lt.s32.totalorder %s22, 1
          %s1358 = scalar_select %p1357, %s22, 1
          %s1359 = smul.addr %s1358, 8
          %s1360 = scalar_lea.vmem %s6, %s1359
        $region64: #{tpu_custom_call.1} parent=51 // pred_fallthru
          _
      $region52: #{tpu_custom_call.1} parent=5 // pred_fallthru
        _
    $region6: #{tpu_custom_call.1} parent=1 // loop_footer
      %s20 = sadd.s32 1, %s16
    $region7: #{tpu_custom_call.1} parent=1 // loop_footer_branch
      %15 = sbr.rel target = $region3
    $region8: #{tpu_custom_call.1} parent=1 // loop_exit
      _
    %1361 = vsyncpa [#allocation4], 1
    %s1362 = scalar_lea.sflag [#allocation4], 1
    %1363 = vsyncpa %s1362, 1

</llo_original>
